<compile_context>
chip_gen: v5e
topology: v5e:2x2
jax: 0.10.0
libtpu: 0.0.40
codegen_flags: <defaults>
</compile_context>

<pallas_src>
import math
import functools
import numpy as np
import jax
import jax.numpy as jnp
from jax.experimental import pallas as pl
from jax.experimental.pallas import tpu as pltpu

TM_MAX = 512                                 # max row tile (sweepable)
_BF = jnp.bfloat16
_PARAMS = pltpu.CompilerParams(
    dimension_semantics=("parallel",),
    vmem_limit_bytes=32 * 1024 * 1024,       # explicit; safe on v5e/v6e/v7x
)


def _silu(x):
    return x * jax.nn.sigmoid(x)


def _bf(x):
    return x.astype(_BF)


# ---------------------------------------------------------------------------
# Pallas kernels (f32 accumulation, bf16 MXU inputs)
# ---------------------------------------------------------------------------
def _linear_kernel(x_ref, w_ref, b_ref, o_ref):
    o_ref[...] = jnp.dot(x_ref[...].astype(_BF), w_ref[...],
                         preferred_element_type=jnp.float32) + b_ref[...]


def _linear_silu_kernel(x_ref, w_ref, b_ref, o_ref):
    h = jnp.dot(x_ref[...].astype(_BF), w_ref[...],
                preferred_element_type=jnp.float32) + b_ref[...]
    o_ref[...] = _silu(h)


def _film_proj_kernel(x_ref, scale_ref, shift_ref,
                      wp_ref, bp_ref, g_ref, beta_ref,
                      w1a_ref, w1b_ref,
                      y_ref, s_ref, t_ref):
    # FiLM (precomputed, layer-invariant scale/shift) fused with the node-side
    # projections of the edge MLP's first layer:
    #   y = silu(LN(x@Wp+bp)*scale + shift) + x ;  s = y@W1a ;  t = y@W1b
    x = x_ref[...]
    h = jnp.dot(x.astype(_BF), wp_ref[...],
                preferred_element_type=jnp.float32) + bp_ref[...]
    mu = jnp.mean(h, axis=-1, keepdims=True)
    var = jnp.mean((h - mu) ** 2, axis=-1, keepdims=True)
    h = (h - mu) * jax.lax.rsqrt(var + 1e-5)
    h = h * g_ref[...] + beta_ref[...]
    h = (h * scale_ref[...].astype(jnp.float32)
         + shift_ref[...].astype(jnp.float32))
    y = _silu(h) + x
    y_ref[...] = y
    y_bf = y.astype(_BF)
    s_ref[...] = jnp.dot(y_bf, w1a_ref[...],
                         preferred_element_type=jnp.float32).astype(_BF)
    t_ref[...] = jnp.dot(y_bf, w1b_ref[...],
                         preferred_element_type=jnp.float32).astype(_BF)


def _edge_kernel(si_ref, tj_ref, st_ref, w1c_ref, b1_ref, w2_ref, b2_ref,
                 o_ref):
    # edge_mlp with the hi/hj projections precomputed on nodes:
    #   silu( silu(s_i + t_j + static@W1c + b1) @ W2 + b2 )
    h = (si_ref[...].astype(jnp.float32) + tj_ref[...].astype(jnp.float32)
         + jnp.dot(st_ref[...], w1c_ref[...],
                   preferred_element_type=jnp.float32)
         + b1_ref[...])
    h = _silu(h)
    h = jnp.dot(h.astype(_BF), w2_ref[...],
                preferred_element_type=jnp.float32) + b2_ref[...]
    o_ref[...] = _silu(h)


def _node_body(nf, agg, w1a_ref, w1b_ref, b1_ref, w2_ref, b2_ref):
    h = (jnp.dot(nf.astype(_BF), w1a_ref[...],
                 preferred_element_type=jnp.float32)
         + jnp.dot(agg.astype(_BF), w1b_ref[...],
                   preferred_element_type=jnp.float32)
         + b1_ref[...])
    h = _silu(h)
    h = jnp.dot(h.astype(_BF), w2_ref[...],
                preferred_element_type=jnp.float32) + b2_ref[...]
    return nf + _silu(h)


def _node_kernel(nf_ref, agg_ref, w1a_ref, w1b_ref, b1_ref, w2_ref, b2_ref,
                 o_ref):
    o_ref[...] = _node_body(nf_ref[...], agg_ref[...],
                            w1a_ref, w1b_ref, b1_ref, w2_ref, b2_ref)


def _node_head_kernel(nf_ref, agg_ref, w1a_ref, w1b_ref, b1_ref, w2_ref,
                      b2_ref, hw_ref, hb_ref, o_ref, heads_ref):
    # Last-layer node update with the fused output heads folded in.
    out = _node_body(nf_ref[...], agg_ref[...],
                     w1a_ref, w1b_ref, b1_ref, w2_ref, b2_ref)
    o_ref[...] = out
    heads_ref[...] = jnp.dot(out.astype(_BF), hw_ref[...],
                             preferred_element_type=jnp.float32) + hb_ref[...]


# ---------------------------------------------------------------------------
# Wrappers (adaptive row tiling + pallas_call plumbing)
# ---------------------------------------------------------------------------
def _choose_tm(m):
    return min(TM_MAX, -(-m // 8) * 8)


def _pad_rows(x, tm):
    m = x.shape[0]
    mp = -(-m // tm) * tm
    if mp != m:
        x = jnp.pad(x, ((0, mp - m), (0, 0)))
    return x, m


def _row2(b):
    return b.reshape(1, -1)


def _rspec(tm, cols):
    return pl.BlockSpec((tm, cols), lambda i: (i, 0))


def _wspec(shape):
    return pl.BlockSpec(shape, lambda i: (0, 0))


def pallas_linear(x, w, b=None, *, act=False):
    din, dout = w.shape
    if b is None:
        b = jnp.zeros((dout,), jnp.float32)
    tm = _choose_tm(x.shape[0])
    xp, m = _pad_rows(x, tm)
    mp = xp.shape[0]
    out = pl.pallas_call(
        _linear_silu_kernel if act else _linear_kernel,
        out_shape=jax.ShapeDtypeStruct((mp, dout), jnp.float32),
        grid=(mp // tm,),
        in_specs=[_rspec(tm, din), _wspec((din, dout)), _wspec((1, dout))],
        out_specs=_rspec(tm, dout),
        compiler_params=_PARAMS,
    )(xp, w, _row2(b))
    return out[:m]


def pallas_film_proj(nf, scale, shift, fp, e_w1a, e_w1b):
    h = nf.shape[1]
    tm = _choose_tm(nf.shape[0])
    nfp, m = _pad_rows(nf, tm)
    scp, _ = _pad_rows(scale, tm)
    shp, _ = _pad_rows(shift, tm)
    mp = nfp.shape[0]
    y, s, t = pl.pallas_call(
        _film_proj_kernel,
        out_shape=(jax.ShapeDtypeStruct((mp, h), jnp.float32),
                   jax.ShapeDtypeStruct((mp, h), _BF),
                   jax.ShapeDtypeStruct((mp, h), _BF)),
        grid=(mp // tm,),
        in_specs=[_rspec(tm, h), _rspec(tm, h), _rspec(tm, h),
                  _wspec((h, h)), _wspec((1, h)), _wspec((1, h)),
                  _wspec((1, h)),
                  _wspec((h, h)), _wspec((h, h))],
        out_specs=[_rspec(tm, h), _rspec(tm, h), _rspec(tm, h)],
        compiler_params=_PARAMS,
    )(nfp, scp, shp, fp['wp'], _row2(fp['bp']), _row2(fp['g']),
      _row2(fp['beta']), e_w1a, e_w1b)
    return y[:m], s[:m], t[:m]


def pallas_edge_mlp(si, tj, static, lp):
    h = lp['e_w2'].shape[0]
    ds = static.shape[1]
    tm = _choose_tm(si.shape[0])
    sip, m = _pad_rows(si, tm)
    tjp, _ = _pad_rows(tj, tm)
    stp, _ = _pad_rows(static, tm)
    mp = sip.shape[0]
    out = pl.pallas_call(
        _edge_kernel,
        out_shape=jax.ShapeDtypeStruct((mp, h), jnp.float32),
        grid=(mp // tm,),
        in_specs=[_rspec(tm, h), _rspec(tm, h), _rspec(tm, ds),
                  _wspec((ds, h)), _wspec((1, h)),
                  _wspec((h, h)), _wspec((1, h))],
        out_specs=_rspec(tm, h),
        compiler_params=_PARAMS,
    )(sip, tjp, stp, lp['e_w1c'], _row2(lp['e_b1']),
      lp['e_w2'], _row2(lp['e_b2']))
    return out[:m]


def pallas_node_update(nf, agg, lp, head_w=None, head_b=None):
    h = nf.shape[1]
    tm = _choose_tm(nf.shape[0])
    nfp, m = _pad_rows(nf, tm)
    agp, _ = _pad_rows(agg, tm)
    mp = nfp.shape[0]
    weights = (lp['n_w1a'], lp['n_w1b'], _row2(lp['n_b1']),
               lp['n_w2'], _row2(lp['n_b2']))
    base_specs = [_rspec(tm, h), _rspec(tm, h),
                  _wspec((h, h)), _wspec((h, h)), _wspec((1, h)),
                  _wspec((h, h)), _wspec((1, h))]
    if head_w is None:
        out = pl.pallas_call(
            _node_kernel,
            out_shape=jax.ShapeDtypeStruct((mp, h), jnp.float32),
            grid=(mp // tm,),
            in_specs=base_specs,
            out_specs=_rspec(tm, h),
            compiler_params=_PARAMS,
        )(nfp, agp, *weights)
        return out[:m]
    dh = head_w.shape[1]
    nf_out, heads = pl.pallas_call(
        _node_head_kernel,
        out_shape=(jax.ShapeDtypeStruct((mp, h), jnp.float32),
                   jax.ShapeDtypeStruct((mp, dh), jnp.float32)),
        grid=(mp // tm,),
        in_specs=base_specs + [_wspec((h, dh)), _wspec((1, dh))],
        out_specs=[_rspec(tm, h), _rspec(tm, dh)],
        compiler_params=_PARAMS,
    )(nfp, agp, *weights, head_w, _row2(head_b))
    return nf_out[:m], heads[:m]


# ---------------------------------------------------------------------------
# Parameter init (deterministic, PyTorch-Linear-style uniform fan-in)
# Weights are pre-cast to bf16 ONCE here (outside jit); biases stay f32.
# ---------------------------------------------------------------------------
def _linear_init(key, din, dout, bias=True):
    k1, k2 = jax.random.split(key)
    bound = 1.0 / math.sqrt(din)
    w = jax.random.uniform(k1, (din, dout), jnp.float32, -bound, bound)
    b = (jax.random.uniform(k2, (dout,), jnp.float32, -bound, bound)
         if bias else None)
    return w, b


def _ceil_to(n, m):
    return -(-n // m) * m


def init_params(key, hidden, time_dim, text_dim, max_atoms, num_layers,
                dis_dim):
    keys = iter(jax.random.split(key, 4 * num_layers + 8))
    p = {}
    w, b = _linear_init(next(keys), max_atoms, hidden)
    p['emb_w'], p['emb_b'] = _bf(w), b

    wc, bc = _linear_init(next(keys), time_dim + text_dim, 2 * hidden)
    wp, bp = _linear_init(next(keys), hidden, hidden)
    p['film'] = dict(wc=_bf(wc), bc=bc, wp=_bf(wp), bp=bp,
                     g=jnp.ones((hidden,), jnp.float32),
                     beta=jnp.zeros((hidden,), jnp.float32))

    ds = 9 + dis_dim                       # [lattice ips | sinusoid dist emb]
    layers = []
    for _ in range(num_layers):
        e_w1, e_b1 = _linear_init(next(keys), 2 * hidden + ds, hidden)
        e_w2, e_b2 = _linear_init(next(keys), hidden, hidden)
        n_w1, n_b1 = _linear_init(next(keys), 2 * hidden, hidden)
        n_w2, n_b2 = _linear_init(next(keys), hidden, hidden)
        layers.append(dict(
            e_w1a=_bf(e_w1[:hidden]),                  # hi row-block
            e_w1b=_bf(e_w1[hidden:2 * hidden]),        # hj row-block
            e_w1c=_bf(e_w1[2 * hidden:]),              # static row-block [ds,H]
            e_b1=e_b1, e_w2=_bf(e_w2), e_b2=e_b2,
            n_w1a=_bf(n_w1[:hidden]), n_w1b=_bf(n_w1[hidden:]), n_b1=n_b1,
            n_w2=_bf(n_w2), n_b2=n_b2))
    p['layers'] = layers

    # Fused, lane-dense output heads: [coord(3) | lattice(9) | type(A) | pad].
    # The lattice head is bias-free so it commutes with the graph segment-mean.
    coord_w, _ = _linear_init(next(keys), hidden, 3, bias=False)
    lat_w, _ = _linear_init(next(keys), hidden, 9, bias=False)
    type_w, type_b = _linear_init(next(keys), hidden, max_atoms)
    hw = jnp.concatenate([coord_w, lat_w, type_w], axis=1)
    hb = jnp.concatenate([jnp.zeros((12,), jnp.float32), type_b])
    hpad = _ceil_to(hw.shape[1], 128)
    p['head_w'] = _bf(jnp.pad(hw, ((0, 0), (0, hpad - hw.shape[1]))))
    p['head_b'] = jnp.pad(hb, (0, hpad - hb.shape[0]))
    return p


# ---------------------------------------------------------------------------
# Graph glue (plain JAX / host)
# ---------------------------------------------------------------------------
def gen_fc_edges(num_atoms_list):
    """Fully-connected (incl. self-loop) edges per graph, dense_to_sparse order."""
    src, dst = [], []
    off = 0
    for n in num_atoms_list:
        for i in range(n):
            for j in range(n):
                src.append(off + i)
                dst.append(off + j)
        off += n
    return (jnp.asarray(np.array(src, np.int32)),
            jnp.asarray(np.array(dst, np.int32)))


def _segment_mean(data, ids, num_segments):
    sums = jax.ops.segment_sum(data, ids, num_segments=num_segments)
    cnts = jax.ops.segment_sum(jnp.ones((data.shape[0], 1), jnp.float32),
                               ids, num_segments=num_segments)
    return sums / jnp.maximum(cnts, 1.0)


# ---------------------------------------------------------------------------
# CSPNet forward (edge_style='fc', smooth=True, dis_emb='sin', ip=True,
#                 ln=False, pred_atom_types=True)
# ---------------------------------------------------------------------------
def cspnet_forward(params, atom_types, frac_coords, lattices, node2graph,
                   src, dst, t, text_embeds, *, num_freqs=10, ip=True,
                   max_atoms=16):
    n_graphs = lattices.shape[0]
    n_nodes = atom_types.shape[0]
    n_edges = src.shape[0]

    # Layer-invariant per-edge static features: [lattice ips | sin/cos dist emb]
    frac_diff = jnp.mod(frac_coords[dst] - frac_coords[src], 1.0)
    freqs = 2.0 * jnp.pi * jnp.arange(num_freqs, dtype=jnp.float32)
    emb = (frac_diff[:, :, None] * freqs[None, None, :]).reshape(
        n_edges, 3 * num_freqs)
    dis_emb = jnp.concatenate([jnp.sin(emb), jnp.cos(emb)], axis=-1)
    lat_ip = jnp.einsum('bij,bkj->bik', lattices, lattices).reshape(n_graphs, 9)
    edge2graph = node2graph[src]
    static_edge = jnp.concatenate([lat_ip[edge2graph], dis_emb],
                                  axis=1).astype(_BF)     # [E, 69] bf16

    # node embedding (smooth=True -> Linear over max_atoms)
    nf = pallas_linear(atom_types, params['emb_w'], params['emb_b'])
    hidden = nf.shape[1]

    # FiLM conditioning hoisted out of the layer loop (identical every layer)
    cond = jnp.concatenate([t[node2graph], text_embeds[node2graph]],
                           axis=1).astype(_BF)
    fp = params['film']
    ss = pallas_linear(cond, fp['wc'], fp['bc'], act=True)       # [N, 2H]
    scale = ss[:, :hidden].astype(_BF)
    shift = ss[:, hidden:].astype(_BF)

    n_layers = len(params['layers'])
    heads = None
    for li, lp in enumerate(params['layers']):
        # FiLM + node-side projections of the edge MLP's first layer
        nf, s_proj, t_proj = pallas_film_proj(nf, scale, shift, fp,
                                              lp['e_w1a'], lp['e_w1b'])
        # TODO(synk): for large graphs gather s_proj[src]/t_proj[dst] inside
        # the edge kernel via scalar-prefetched row index_maps instead of the
        # XLA gathers below.
        ef = pallas_edge_mlp(s_proj[src], t_proj[dst], static_edge, lp)
        # CSPLayer node model (scatter_mean over source index) + residual;
        # heads fused into the last layer's node update
        agg = _segment_mean(ef, src, n_nodes)
        if li == n_layers - 1:
            nf, heads = pallas_node_update(nf, agg, lp,
                                           head_w=params['head_w'],
                                           head_b=params['head_b'])
        else:
            nf = pallas_node_update(nf, agg, lp)

    coord_out = heads[:, :3]
    lat_node = heads[:, 3:12]
    type_out = heads[:, 12:12 + max_atoms]
    lattice_out = _segment_mean(lat_node, node2graph,
                                n_graphs).reshape(n_graphs, 3, 3)
    if ip:
        lattice_out = jnp.einsum('bij,bjk->bik', lattice_out, lattices)
    return type_out, lattice_out, coord_out, nf


# ---------------------------------------------------------------------------
if __name__ == "__main__":
    HIDDEN, TIME_DIM, TEXT_DIM = 128, 64, 64
    MAX_ATOMS, NUM_LAYERS, NUM_FREQS = 16, 2, 10
    DIS_DIM = NUM_FREQS * 2 * 3

    num_atoms_list = [3, 5]
    n_graphs = len(num_atoms_list)
    n_nodes = sum(num_atoms_list)

    key = jax.random.PRNGKey(0)
    kp, k1, k2, k3, k4, k5 = jax.random.split(key, 6)

    params = init_params(kp, HIDDEN, TIME_DIM, TEXT_DIM, MAX_ATOMS,
                         NUM_LAYERS, DIS_DIM)

    atom_types = jax.nn.softmax(
        jax.random.normal(k1, (n_nodes, MAX_ATOMS), jnp.float32), axis=-1)
    frac_coords = jax.random.uniform(k2, (n_nodes, 3), jnp.float32)
    lattices = (jnp.tile(jnp.eye(3, dtype=jnp.float32)[None], (n_graphs, 1, 1))
                + 0.1 * jax.random.normal(k3, (n_graphs, 3, 3), jnp.float32))
    t = jax.random.normal(k4, (n_graphs, TIME_DIM), jnp.float32)
    text_embeds = jax.random.normal(k5, (n_graphs, TEXT_DIM), jnp.float32)

    node2graph = jnp.asarray(
        np.repeat(np.arange(n_graphs), num_atoms_list).astype(np.int32))
    src, dst = gen_fc_edges(num_atoms_list)

    fwd = jax.jit(functools.partial(cspnet_forward, num_freqs=NUM_FREQS,
                                    ip=True, max_atoms=MAX_ATOMS))
    type_out, lattice_out, coord_out, node_feats = jax.block_until_ready(
        fwd(params, atom_types, frac_coords, lattices, node2graph,
            src, dst, t, text_embeds))

    assert type_out.shape == (n_nodes, MAX_ATOMS)
    assert lattice_out.shape == (n_graphs, 3, 3)
    assert coord_out.shape == (n_nodes, 3)
    assert node_feats.shape == (n_nodes, HIDDEN)
    for out in (type_out, lattice_out, coord_out, node_feats):
        assert bool(jnp.all(jnp.isfinite(out)))
    print("KERNEL_OK")
</pallas_src>

<mosaic_0001>
module attributes {stable_mosaic.version = 11 : i64} {
  func.func @_linear_silu_kernel(%arg0: i32, %arg1: memref<8x128xbf16, #tpu.memory_space<vmem>>, %arg2: memref<128x256xbf16, #tpu.memory_space<vmem>>, %arg3: memref<1x256xf32, #tpu.memory_space<vmem>>, %arg4: memref<8x256xf32, #tpu.memory_space<vmem>>) attributes {dimension_semantics = [#tpu.dimension_semantics<parallel>], iteration_bounds = array<i64: 1>, scalar_prefetch = 0 : i64, scratch_operands = 0 : i64, tpu.core_type = #tpu.core_type<tc>, window_params = [{transform_indices = @transform_0, window_bounds = array<i64: 8, 128>}, {pipeline_mode = #tpu.pipeline_mode<synchronous>, transform_indices = @transform_1, window_bounds = array<i64: 128, 256>}, {pipeline_mode = #tpu.pipeline_mode<synchronous>, transform_indices = @transform_2, window_bounds = array<i64: 1, 256>}, {transform_indices = @transform_3, window_bounds = array<i64: 8, 256>}]} {
    %c0 = arith.constant 0 : index
    %c0_0 = arith.constant 0 : index
    %0 = vector.load %arg1[%c0, %c0_0] : memref<8x128xbf16, #tpu.memory_space<vmem>>, vector<8x128xbf16>
    %c0_1 = arith.constant 0 : index
    %c0_2 = arith.constant 0 : index
    %1 = vector.load %arg2[%c0_1, %c0_2] : memref<128x256xbf16, #tpu.memory_space<vmem>>, vector<128x256xbf16>
    %cst = arith.constant dense<0.000000e+00> : vector<8x256xf32>
    %2 = tpu.matmul %0, %1, %cst {dimension_numbers = #tpu.dot_dimension_numbers<[1], [0], [0], [1], [0, 0, 1, 1], [], []>} : vector<8x128xbf16>, vector<128x256xbf16>, vector<8x256xf32> -> vector<8x256xf32>
    %c0_3 = arith.constant 0 : index
    %c0_4 = arith.constant 0 : index
    %3 = vector.load %arg3[%c0_3, %c0_4] : memref<1x256xf32, #tpu.memory_space<vmem>>, vector<1x256xf32>
    %4 = vector.broadcast %3 : vector<1x256xf32> to vector<8x256xf32>
    %5 = arith.addf %2, %4 : vector<8x256xf32>
    %6 = arith.negf %5 : vector<8x256xf32>
    %7 = math.exp %6 : vector<8x256xf32>
    %cst_5 = arith.constant 1.000000e+00 : f32
    %8 = vector.broadcast %cst_5 : f32 to vector<8x256xf32>
    %9 = arith.addf %8, %7 : vector<8x256xf32>
    %10 = arith.divf %8, %9 : vector<8x256xf32>
    %11 = arith.mulf %5, %10 : vector<8x256xf32>
    %c0_6 = arith.constant 0 : index
    %c0_7 = arith.constant 0 : index
    %12 = vector.load %arg4[%c0_6, %c0_7] : memref<8x256xf32, #tpu.memory_space<vmem>>, vector<8x256xf32>
    tpu.vector_store %arg4[%c0_6, %c0_7], %11 {strides = array<i32>} : memref<8x256xf32, #tpu.memory_space<vmem>>, vector<8x256xf32>,
    return
  }
  func.func @transform_0(%arg0: i32) -> (i32, i32) {
    %c0_i32 = arith.constant 0 : i32
    %c0_i32_0 = arith.constant 0 : i32
    return %arg0, %c0_i32 : i32, i32
  }
  func.func @transform_1(%arg0: i32) -> (i32, i32) {
    %c0_i32 = arith.constant 0 : i32
    %c0_i32_0 = arith.constant 0 : i32
    %c0_i32_1 = arith.constant 0 : i32
    return %c0_i32, %c0_i32_0 : i32, i32
  }
  func.func @transform_2(%arg0: i32) -> (i32, i32) {
    %c0_i32 = arith.constant 0 : i32
    %c0_i32_0 = arith.constant 0 : i32
    %c0_i32_1 = arith.constant 0 : i32
    return %c0_i32, %c0_i32_0 : i32, i32
  }
  func.func @transform_3(%arg0: i32) -> (i32, i32) {
    %c0_i32 = arith.constant 0 : i32
    %c0_i32_0 = arith.constant 0 : i32
    return %arg0, %c0_i32 : i32, i32
  }
}

module attributes {stable_mosaic.version = 11 : i64} {
  func.func @_linear_kernel(%arg0: i32, %arg1: memref<8x16xf32, #tpu.memory_space<vmem>>, %arg2: memref<16x128xbf16, #tpu.memory_space<vmem>>, %arg3: memref<1x128xf32, #tpu.memory_space<vmem>>, %arg4: memref<8x128xf32, #tpu.memory_space<vmem>>) attributes {dimension_semantics = [#tpu.dimension_semantics<parallel>], iteration_bounds = array<i64: 1>, scalar_prefetch = 0 : i64, scratch_operands = 0 : i64, tpu.core_type = #tpu.core_type<tc>, window_params = [{transform_indices = @transform_0, window_bounds = array<i64: 8, 16>}, {pipeline_mode = #tpu.pipeline_mode<synchronous>, transform_indices = @transform_1, window_bounds = array<i64: 16, 128>}, {pipeline_mode = #tpu.pipeline_mode<synchronous>, transform_indices = @transform_2, window_bounds = array<i64: 1, 128>}, {transform_indices = @transform_3, window_bounds = array<i64: 8, 128>}]} {
    %c0 = arith.constant 0 : index
    %c0_0 = arith.constant 0 : index
    %0 = vector.load %arg1[%c0, %c0_0] : memref<8x16xf32, #tpu.memory_space<vmem>>, vector<8x16xf32>
    %1 = arith.truncf %0 : vector<8x16xf32> to vector<8x16xbf16>
    %c0_1 = arith.constant 0 : index
    %c0_2 = arith.constant 0 : index
    %2 = vector.load %arg2[%c0_1, %c0_2] : memref<16x128xbf16, #tpu.memory_space<vmem>>, vector<16x128xbf16>
    %cst = arith.constant dense<0.000000e+00> : vector<8x128xf32>
    %3 = tpu.matmul %1, %2, %cst {dimension_numbers = #tpu.dot_dimension_numbers<[1], [0], [0], [1], [0, 0, 1, 1], [], []>} : vector<8x16xbf16>, vector<16x128xbf16>, vector<8x128xf32> -> vector<8x128xf32>
    %c0_3 = arith.constant 0 : index
    %c0_4 = arith.constant 0 : index
    %4 = vector.load %arg3[%c0_3, %c0_4] : memref<1x128xf32, #tpu.memory_space<vmem>>, vector<1x128xf32>
    %5 = vector.broadcast %4 : vector<1x128xf32> to vector<8x128xf32>
    %6 = arith.addf %3, %5 : vector<8x128xf32>
    %c0_5 = arith.constant 0 : index
    %c0_6 = arith.constant 0 : index
    %7 = vector.load %arg4[%c0_5, %c0_6] : memref<8x128xf32, #tpu.memory_space<vmem>>, vector<8x128xf32>
    tpu.vector_store %arg4[%c0_5, %c0_6], %6 {strides = array<i32>} : memref<8x128xf32, #tpu.memory_space<vmem>>, vector<8x128xf32>,
    return
  }
  func.func @transform_0(%arg0: i32) -> (i32, i32) {
    %c0_i32 = arith.constant 0 : i32
    %c0_i32_0 = arith.constant 0 : i32
    return %arg0, %c0_i32 : i32, i32
  }
  func.func @transform_1(%arg0: i32) -> (i32, i32) {
    %c0_i32 = arith.constant 0 : i32
    %c0_i32_0 = arith.constant 0 : i32
    %c0_i32_1 = arith.constant 0 : i32
    return %c0_i32, %c0_i32_0 : i32, i32
  }
  func.func @transform_2(%arg0: i32) -> (i32, i32) {
    %c0_i32 = arith.constant 0 : i32
    %c0_i32_0 = arith.constant 0 : i32
    %c0_i32_1 = arith.constant 0 : i32
    return %c0_i32, %c0_i32_0 : i32, i32
  }
  func.func @transform_3(%arg0: i32) -> (i32, i32) {
    %c0_i32 = arith.constant 0 : i32
    %c0_i32_0 = arith.constant 0 : i32
    return %arg0, %c0_i32 : i32, i32
  }
}

module attributes {stable_mosaic.version = 11 : i64} {
  func.func @_film_proj_kernel(%arg0: i32, %arg1: memref<8x128xf32, #tpu.memory_space<vmem>>, %arg2: memref<8x128xbf16, #tpu.memory_space<vmem>>, %arg3: memref<8x128xbf16, #tpu.memory_space<vmem>>, %arg4: memref<128x128xbf16, #tpu.memory_space<vmem>>, %arg5: memref<1x128xf32, #tpu.memory_space<vmem>>, %arg6: memref<1x128xf32, #tpu.memory_space<vmem>>, %arg7: memref<1x128xf32, #tpu.memory_space<vmem>>, %arg8: memref<128x128xbf16, #tpu.memory_space<vmem>>, %arg9: memref<128x128xbf16, #tpu.memory_space<vmem>>, %arg10: memref<8x128xf32, #tpu.memory_space<vmem>>, %arg11: memref<8x128xbf16, #tpu.memory_space<vmem>>, %arg12: memref<8x128xbf16, #tpu.memory_space<vmem>>) attributes {dimension_semantics = [#tpu.dimension_semantics<parallel>], iteration_bounds = array<i64: 1>, scalar_prefetch = 0 : i64, scratch_operands = 0 : i64, tpu.core_type = #tpu.core_type<tc>, window_params = [{transform_indices = @transform_0, window_bounds = array<i64: 8, 128>}, {transform_indices = @transform_1, window_bounds = array<i64: 8, 128>}, {transform_indices = @transform_2, window_bounds = array<i64: 8, 128>}, {pipeline_mode = #tpu.pipeline_mode<synchronous>, transform_indices = @transform_3, window_bounds = array<i64: 128, 128>}, {pipeline_mode = #tpu.pipeline_mode<synchronous>, transform_indices = @transform_4, window_bounds = array<i64: 1, 128>}, {pipeline_mode = #tpu.pipeline_mode<synchronous>, transform_indices = @transform_5, window_bounds = array<i64: 1, 128>}, {pipeline_mode = #tpu.pipeline_mode<synchronous>, transform_indices = @transform_6, window_bounds = array<i64: 1, 128>}, {pipeline_mode = #tpu.pipeline_mode<synchronous>, transform_indices = @transform_7, window_bounds = array<i64: 128, 128>}, {pipeline_mode = #tpu.pipeline_mode<synchronous>, transform_indices = @transform_8, window_bounds = array<i64: 128, 128>}, {transform_indices = @transform_9, window_bounds = array<i64: 8, 128>}, {transform_indices = @transform_10, window_bounds = array<i64: 8, 128>}, {transform_indices = @transform_11, window_bounds = array<i64: 8, 128>}]} {
    %c0 = arith.constant 0 : index
    %c0_0 = arith.constant 0 : index
    %0 = vector.load %arg1[%c0, %c0_0] : memref<8x128xf32, #tpu.memory_space<vmem>>, vector<8x128xf32>
    %1 = arith.truncf %0 : vector<8x128xf32> to vector<8x128xbf16>
    %c0_1 = arith.constant 0 : index
    %c0_2 = arith.constant 0 : index
    %2 = vector.load %arg4[%c0_1, %c0_2] : memref<128x128xbf16, #tpu.memory_space<vmem>>, vector<128x128xbf16>
    %cst = arith.constant dense<0.000000e+00> : vector<8x128xf32>
    %3 = tpu.matmul %1, %2, %cst {dimension_numbers = #tpu.dot_dimension_numbers<[1], [0], [0], [1], [0, 0, 1, 1], [], []>} : vector<8x128xbf16>, vector<128x128xbf16>, vector<8x128xf32> -> vector<8x128xf32>
    %c0_3 = arith.constant 0 : index
    %c0_4 = arith.constant 0 : index
    %4 = vector.load %arg5[%c0_3, %c0_4] : memref<1x128xf32, #tpu.memory_space<vmem>>, vector<1x128xf32>
    %5 = vector.broadcast %4 : vector<1x128xf32> to vector<8x128xf32>
    %6 = arith.addf %3, %5 : vector<8x128xf32>
    %cst_5 = arith.constant dense<0.000000e+00> : vector<8xf32>
    %7 = vector.multi_reduction <add>, %6, %cst_5 [1] : vector<8x128xf32> to vector<8xf32>
    %8 = vector.shape_cast %7 : vector<8xf32> to vector<8x1xf32>
    %cst_6 = arith.constant 1.280000e+02 : f32
    %9 = vector.broadcast %cst_6 : f32 to vector<8x1xf32>
    %10 = arith.divf %8, %9 : vector<8x1xf32>
    %11 = vector.broadcast %10 : vector<8x1xf32> to vector<8x128xf32>
    %12 = arith.subf %6, %11 : vector<8x128xf32>
    %13 = arith.mulf %12, %12 : vector<8x128xf32>
    %cst_7 = arith.constant dense<0.000000e+00> : vector<8xf32>
    %14 = vector.multi_reduction <add>, %13, %cst_7 [1] : vector<8x128xf32> to vector<8xf32>
    %15 = vector.shape_cast %14 : vector<8xf32> to vector<8x1xf32>
    %cst_8 = arith.constant 1.280000e+02 : f32
    %16 = vector.broadcast %cst_8 : f32 to vector<8x1xf32>
    %17 = arith.divf %15, %16 : vector<8x1xf32>
    %18 = vector.broadcast %10 : vector<8x1xf32> to vector<8x128xf32>
    %19 = arith.subf %6, %18 : vector<8x128xf32>
    %cst_9 = arith.constant 9.99999974E-6 : f32
    %20 = vector.broadcast %cst_9 : f32 to vector<8x1xf32>
    %21 = arith.addf %17, %20 : vector<8x1xf32>
    %22 = math.rsqrt %21 : vector<8x1xf32>
    %23 = vector.broadcast %22 : vector<8x1xf32> to vector<8x128xf32>
    %24 = arith.mulf %19, %23 : vector<8x128xf32>
    %c0_10 = arith.constant 0 : index
    %c0_11 = arith.constant 0 : index
    %25 = vector.load %arg6[%c0_10, %c0_11] : memref<1x128xf32, #tpu.memory_space<vmem>>, vector<1x128xf32>
    %26 = vector.broadcast %25 : vector<1x128xf32> to vector<8x128xf32>
    %27 = arith.mulf %24, %26 : vector<8x128xf32>
    %c0_12 = arith.constant 0 : index
    %c0_13 = arith.constant 0 : index
    %28 = vector.load %arg7[%c0_12, %c0_13] : memref<1x128xf32, #tpu.memory_space<vmem>>, vector<1x128xf32>
    %29 = vector.broadcast %28 : vector<1x128xf32> to vector<8x128xf32>
    %30 = arith.addf %27, %29 : vector<8x128xf32>
    %c0_14 = arith.constant 0 : index
    %c0_15 = arith.constant 0 : index
    %31 = vector.load %arg2[%c0_14, %c0_15] : memref<8x128xbf16, #tpu.memory_space<vmem>>, vector<8x128xbf16>
    %32 = arith.extf %31 : vector<8x128xbf16> to vector<8x128xf32>
    %33 = arith.mulf %30, %32 : vector<8x128xf32>
    %c0_16 = arith.constant 0 : index
    %c0_17 = arith.constant 0 : index
    %34 = vector.load %arg3[%c0_16, %c0_17] : memref<8x128xbf16, #tpu.memory_space<vmem>>, vector<8x128xbf16>
    %35 = arith.extf %34 : vector<8x128xbf16> to vector<8x128xf32>
    %36 = arith.addf %33, %35 : vector<8x128xf32>
    %37 = arith.negf %36 : vector<8x128xf32>
    %38 = math.exp %37 : vector<8x128xf32>
    %cst_18 = arith.constant 1.000000e+00 : f32
    %39 = vector.broadcast %cst_18 : f32 to vector<8x128xf32>
    %40 = arith.addf %39, %38 : vector<8x128xf32>
    %41 = arith.divf %39, %40 : vector<8x128xf32>
    %42 = arith.mulf %36, %41 : vector<8x128xf32>
    %43 = arith.addf %42, %0 : vector<8x128xf32>
    %c0_19 = arith.constant 0 : index
    %c0_20 = arith.constant 0 : index
    %44 = vector.load %arg10[%c0_19, %c0_20] : memref<8x128xf32, #tpu.memory_space<vmem>>, vector<8x128xf32>
    tpu.vector_store %arg10[%c0_19, %c0_20], %43 {strides = array<i32>} : memref<8x128xf32, #tpu.memory_space<vmem>>, vector<8x128xf32>,
    %45 = arith.truncf %43 : vector<8x128xf32> to vector<8x128xbf16>
    %c0_21 = arith.constant 0 : index
    %c0_22 = arith.constant 0 : index
    %46 = vector.load %arg8[%c0_21, %c0_22] : memref<128x128xbf16, #tpu.memory_space<vmem>>, vector<128x128xbf16>
    %cst_23 = arith.constant dense<0.000000e+00> : vector<8x128xf32>
    %47 = tpu.matmul %45, %46, %cst_23 {dimension_numbers = #tpu.dot_dimension_numbers<[1], [0], [0], [1], [0, 0, 1, 1], [], []>} : vector<8x128xbf16>, vector<128x128xbf16>, vector<8x128xf32> -> vector<8x128xf32>
    %48 = arith.truncf %47 : vector<8x128xf32> to vector<8x128xbf16>
    %c0_24 = arith.constant 0 : index
    %c0_25 = arith.constant 0 : index
    %49 = vector.load %arg11[%c0_24, %c0_25] : memref<8x128xbf16, #tpu.memory_space<vmem>>, vector<8x128xbf16>
    tpu.vector_store %arg11[%c0_24, %c0_25], %48 {strides = array<i32>} : memref<8x128xbf16, #tpu.memory_space<vmem>>, vector<8x128xbf16>,
    %c0_26 = arith.constant 0 : index
    %c0_27 = arith.constant 0 : index
    %50 = vector.load %arg9[%c0_26, %c0_27] : memref<128x128xbf16, #tpu.memory_space<vmem>>, vector<128x128xbf16>
    %cst_28 = arith.constant dense<0.000000e+00> : vector<8x128xf32>
    %51 = tpu.matmul %45, %50, %cst_28 {dimension_numbers = #tpu.dot_dimension_numbers<[1], [0], [0], [1], [0, 0, 1, 1], [], []>} : vector<8x128xbf16>, vector<128x128xbf16>, vector<8x128xf32> -> vector<8x128xf32>
    %52 = arith.truncf %51 : vector<8x128xf32> to vector<8x128xbf16>
    %c0_29 = arith.constant 0 : index
    %c0_30 = arith.constant 0 : index
    %53 = vector.load %arg12[%c0_29, %c0_30] : memref<8x128xbf16, #tpu.memory_space<vmem>>, vector<8x128xbf16>
    tpu.vector_store %arg12[%c0_29, %c0_30], %52 {strides = array<i32>} : memref<8x128xbf16, #tpu.memory_space<vmem>>, vector<8x128xbf16>,
    return
  }
  func.func @transform_0(%arg0: i32) -> (i32, i32) {
    %c0_i32 = arith.constant 0 : i32
    %c0_i32_0 = arith.constant 0 : i32
    return %arg0, %c0_i32 : i32, i32
  }
  func.func @transform_1(%arg0: i32) -> (i32, i32) {
    %c0_i32 = arith.constant 0 : i32
    %c0_i32_0 = arith.constant 0 : i32
    return %arg0, %c0_i32 : i32, i32
  }
  func.func @transform_2(%arg0: i32) -> (i32, i32) {
    %c0_i32 = arith.constant 0 : i32
    %c0_i32_0 = arith.constant 0 : i32
    return %arg0, %c0_i32 : i32, i32
  }
  func.func @transform_3(%arg0: i32) -> (i32, i32) {
    %c0_i32 = arith.constant 0 : i32
    %c0_i32_0 = arith.constant 0 : i32
    %c0_i32_1 = arith.constant 0 : i32
    return %c0_i32, %c0_i32_0 : i32, i32
  }
  func.func @transform_4(%arg0: i32) -> (i32, i32) {
    %c0_i32 = arith.constant 0 : i32
    %c0_i32_0 = arith.constant 0 : i32
    %c0_i32_1 = arith.constant 0 : i32
    return %c0_i32, %c0_i32_0 : i32, i32
  }
  func.func @transform_5(%arg0: i32) -> (i32, i32) {
    %c0_i32 = arith.constant 0 : i32
    %c0_i32_0 = arith.constant 0 : i32
    %c0_i32_1 = arith.constant 0 : i32
    return %c0_i32, %c0_i32_0 : i32, i32
  }
  func.func @transform_6(%arg0: i32) -> (i32, i32) {
    %c0_i32 = arith.constant 0 : i32
    %c0_i32_0 = arith.constant 0 : i32
    %c0_i32_1 = arith.constant 0 : i32
    return %c0_i32, %c0_i32_0 : i32, i32
  }
  func.func @transform_7(%arg0: i32) -> (i32, i32) {
    %c0_i32 = arith.constant 0 : i32
    %c0_i32_0 = arith.constant 0 : i32
    %c0_i32_1 = arith.constant 0 : i32
    return %c0_i32, %c0_i32_0 : i32, i32
  }
  func.func @transform_8(%arg0: i32) -> (i32, i32) {
    %c0_i32 = arith.constant 0 : i32
    %c0_i32_0 = arith.constant 0 : i32
    %c0_i32_1 = arith.constant 0 : i32
    return %c0_i32, %c0_i32_0 : i32, i32
  }
  func.func @transform_9(%arg0: i32) -> (i32, i32) {
    %c0_i32 = arith.constant 0 : i32
    %c0_i32_0 = arith.constant 0 : i32
    return %arg0, %c0_i32 : i32, i32
  }
  func.func @transform_10(%arg0: i32) -> (i32, i32) {
    %c0_i32 = arith.constant 0 : i32
    %c0_i32_0 = arith.constant 0 : i32
    return %arg0, %c0_i32 : i32, i32
  }
  func.func @transform_11(%arg0: i32) -> (i32, i32) {
    %c0_i32 = arith.constant 0 : i32
    %c0_i32_0 = arith.constant 0 : i32
    return %arg0, %c0_i32 : i32, i32
  }
}

module attributes {stable_mosaic.version = 11 : i64} {
  func.func @_edge_kernel(%arg0: i32, %arg1: memref<40x128xbf16, #tpu.memory_space<vmem>>, %arg2: memref<40x128xbf16, #tpu.memory_space<vmem>>, %arg3: memref<40x69xbf16, #tpu.memory_space<vmem>>, %arg4: memref<69x128xbf16, #tpu.memory_space<vmem>>, %arg5: memref<1x128xf32, #tpu.memory_space<vmem>>, %arg6: memref<128x128xbf16, #tpu.memory_space<vmem>>, %arg7: memref<1x128xf32, #tpu.memory_space<vmem>>, %arg8: memref<40x128xf32, #tpu.memory_space<vmem>>) attributes {dimension_semantics = [#tpu.dimension_semantics<parallel>], iteration_bounds = array<i64: 1>, scalar_prefetch = 0 : i64, scratch_operands = 0 : i64, tpu.core_type = #tpu.core_type<tc>, window_params = [{transform_indices = @transform_0, window_bounds = array<i64: 40, 128>}, {transform_indices = @transform_1, window_bounds = array<i64: 40, 128>}, {transform_indices = @transform_2, window_bounds = array<i64: 40, 69>}, {pipeline_mode = #tpu.pipeline_mode<synchronous>, transform_indices = @transform_3, window_bounds = array<i64: 69, 128>}, {pipeline_mode = #tpu.pipeline_mode<synchronous>, transform_indices = @transform_4, window_bounds = array<i64: 1, 128>}, {pipeline_mode = #tpu.pipeline_mode<synchronous>, transform_indices = @transform_5, window_bounds = array<i64: 128, 128>}, {pipeline_mode = #tpu.pipeline_mode<synchronous>, transform_indices = @transform_6, window_bounds = array<i64: 1, 128>}, {transform_indices = @transform_7, window_bounds = array<i64: 40, 128>}]} {
    %c0 = arith.constant 0 : index
    %c0_0 = arith.constant 0 : index
    %0 = vector.load %arg1[%c0, %c0_0] : memref<40x128xbf16, #tpu.memory_space<vmem>>, vector<40x128xbf16>
    %1 = arith.extf %0 : vector<40x128xbf16> to vector<40x128xf32>
    %c0_1 = arith.constant 0 : index
    %c0_2 = arith.constant 0 : index
    %2 = vector.load %arg2[%c0_1, %c0_2] : memref<40x128xbf16, #tpu.memory_space<vmem>>, vector<40x128xbf16>
    %3 = arith.extf %2 : vector<40x128xbf16> to vector<40x128xf32>
    %4 = arith.addf %1, %3 : vector<40x128xf32>
    %c0_3 = arith.constant 0 : index
    %c0_4 = arith.constant 0 : index
    %5 = vector.load %arg3[%c0_3, %c0_4] : memref<40x69xbf16, #tpu.memory_space<vmem>>, vector<40x69xbf16>
    %c0_5 = arith.constant 0 : index
    %c0_6 = arith.constant 0 : index
    %6 = vector.load %arg4[%c0_5, %c0_6] : memref<69x128xbf16, #tpu.memory_space<vmem>>, vector<69x128xbf16>
    %cst = arith.constant dense<0.000000e+00> : vector<40x128xf32>
    %7 = tpu.matmul %5, %6, %cst {dimension_numbers = #tpu.dot_dimension_numbers<[1], [0], [0], [1], [0, 0, 1, 1], [], []>} : vector<40x69xbf16>, vector<69x128xbf16>, vector<40x128xf32> -> vector<40x128xf32>
    %8 = arith.addf %4, %7 : vector<40x128xf32>
    %c0_7 = arith.constant 0 : index
    %c0_8 = arith.constant 0 : index
    %9 = vector.load %arg5[%c0_7, %c0_8] : memref<1x128xf32, #tpu.memory_space<vmem>>, vector<1x128xf32>
    %10 = vector.broadcast %9 : vector<1x128xf32> to vector<40x128xf32>
    %11 = arith.addf %8, %10 : vector<40x128xf32>
    %12 = arith.negf %11 : vector<40x128xf32>
    %13 = math.exp %12 : vector<40x128xf32>
    %cst_9 = arith.constant 1.000000e+00 : f32
    %14 = vector.broadcast %cst_9 : f32 to vector<40x128xf32>
    %15 = arith.addf %14, %13 : vector<40x128xf32>
    %16 = arith.divf %14, %15 : vector<40x128xf32>
    %17 = arith.mulf %11, %16 : vector<40x128xf32>
    %18 = arith.truncf %17 : vector<40x128xf32> to vector<40x128xbf16>
    %c0_10 = arith.constant 0 : index
    %c0_11 = arith.constant 0 : index
    %19 = vector.load %arg6[%c0_10, %c0_11] : memref<128x128xbf16, #tpu.memory_space<vmem>>, vector<128x128xbf16>
    %cst_12 = arith.constant dense<0.000000e+00> : vector<40x128xf32>
    %20 = tpu.matmul %18, %19, %cst_12 {dimension_numbers = #tpu.dot_dimension_numbers<[1], [0], [0], [1], [0, 0, 1, 1], [], []>} : vector<40x128xbf16>, vector<128x128xbf16>, vector<40x128xf32> -> vector<40x128xf32>
    %c0_13 = arith.constant 0 : index
    %c0_14 = arith.constant 0 : index
    %21 = vector.load %arg7[%c0_13, %c0_14] : memref<1x128xf32, #tpu.memory_space<vmem>>, vector<1x128xf32>
    %22 = vector.broadcast %21 : vector<1x128xf32> to vector<40x128xf32>
    %23 = arith.addf %20, %22 : vector<40x128xf32>
    %24 = arith.negf %23 : vector<40x128xf32>
    %25 = math.exp %24 : vector<40x128xf32>
    %cst_15 = arith.constant 1.000000e+00 : f32
    %26 = vector.broadcast %cst_15 : f32 to vector<40x128xf32>
    %27 = arith.addf %26, %25 : vector<40x128xf32>
    %28 = arith.divf %26, %27 : vector<40x128xf32>
    %29 = arith.mulf %23, %28 : vector<40x128xf32>
    %c0_16 = arith.constant 0 : index
    %c0_17 = arith.constant 0 : index
    %30 = vector.load %arg8[%c0_16, %c0_17] : memref<40x128xf32, #tpu.memory_space<vmem>>, vector<40x128xf32>
    tpu.vector_store %arg8[%c0_16, %c0_17], %29 {strides = array<i32>} : memref<40x128xf32, #tpu.memory_space<vmem>>, vector<40x128xf32>,
    return
  }
  func.func @transform_0(%arg0: i32) -> (i32, i32) {
    %c0_i32 = arith.constant 0 : i32
    %c0_i32_0 = arith.constant 0 : i32
    return %arg0, %c0_i32 : i32, i32
  }
  func.func @transform_1(%arg0: i32) -> (i32, i32) {
    %c0_i32 = arith.constant 0 : i32
    %c0_i32_0 = arith.constant 0 : i32
    return %arg0, %c0_i32 : i32, i32
  }
  func.func @transform_2(%arg0: i32) -> (i32, i32) {
    %c0_i32 = arith.constant 0 : i32
    %c0_i32_0 = arith.constant 0 : i32
    return %arg0, %c0_i32 : i32, i32
  }
  func.func @transform_3(%arg0: i32) -> (i32, i32) {
    %c0_i32 = arith.constant 0 : i32
    %c0_i32_0 = arith.constant 0 : i32
    %c0_i32_1 = arith.constant 0 : i32
    return %c0_i32, %c0_i32_0 : i32, i32
  }
  func.func @transform_4(%arg0: i32) -> (i32, i32) {
    %c0_i32 = arith.constant 0 : i32
    %c0_i32_0 = arith.constant 0 : i32
    %c0_i32_1 = arith.constant 0 : i32
    return %c0_i32, %c0_i32_0 : i32, i32
  }
  func.func @transform_5(%arg0: i32) -> (i32, i32) {
    %c0_i32 = arith.constant 0 : i32
    %c0_i32_0 = arith.constant 0 : i32
    %c0_i32_1 = arith.constant 0 : i32
    return %c0_i32, %c0_i32_0 : i32, i32
  }
  func.func @transform_6(%arg0: i32) -> (i32, i32) {
    %c0_i32 = arith.constant 0 : i32
    %c0_i32_0 = arith.constant 0 : i32
    %c0_i32_1 = arith.constant 0 : i32
    return %c0_i32, %c0_i32_0 : i32, i32
  }
  func.func @transform_7(%arg0: i32) -> (i32, i32) {
    %c0_i32 = arith.constant 0 : i32
    %c0_i32_0 = arith.constant 0 : i32
    return %arg0, %c0_i32 : i32, i32
  }
}

module attributes {stable_mosaic.version = 11 : i64} {
  func.func @_node_head_kernel(%arg0: i32, %arg1: memref<8x128xf32, #tpu.memory_space<vmem>>, %arg2: memref<8x128xf32, #tpu.memory_space<vmem>>, %arg3: memref<128x128xbf16, #tpu.memory_space<vmem>>, %arg4: memref<128x128xbf16, #tpu.memory_space<vmem>>, %arg5: memref<1x128xf32, #tpu.memory_space<vmem>>, %arg6: memref<128x128xbf16, #tpu.memory_space<vmem>>, %arg7: memref<1x128xf32, #tpu.memory_space<vmem>>, %arg8: memref<128x128xbf16, #tpu.memory_space<vmem>>, %arg9: memref<1x128xf32, #tpu.memory_space<vmem>>, %arg10: memref<8x128xf32, #tpu.memory_space<vmem>>, %arg11: memref<8x128xf32, #tpu.memory_space<vmem>>) attributes {dimension_semantics = [#tpu.dimension_semantics<parallel>], iteration_bounds = array<i64: 1>, scalar_prefetch = 0 : i64, scratch_operands = 0 : i64, tpu.core_type = #tpu.core_type<tc>, window_params = [{transform_indices = @transform_0, window_bounds = array<i64: 8, 128>}, {transform_indices = @transform_1, window_bounds = array<i64: 8, 128>}, {pipeline_mode = #tpu.pipeline_mode<synchronous>, transform_indices = @transform_2, window_bounds = array<i64: 128, 128>}, {pipeline_mode = #tpu.pipeline_mode<synchronous>, transform_indices = @transform_3, window_bounds = array<i64: 128, 128>}, {pipeline_mode = #tpu.pipeline_mode<synchronous>, transform_indices = @transform_4, window_bounds = array<i64: 1, 128>}, {pipeline_mode = #tpu.pipeline_mode<synchronous>, transform_indices = @transform_5, window_bounds = array<i64: 128, 128>}, {pipeline_mode = #tpu.pipeline_mode<synchronous>, transform_indices = @transform_6, window_bounds = array<i64: 1, 128>}, {pipeline_mode = #tpu.pipeline_mode<synchronous>, transform_indices = @transform_7, window_bounds = array<i64: 128, 128>}, {pipeline_mode = #tpu.pipeline_mode<synchronous>, transform_indices = @transform_8, window_bounds = array<i64: 1, 128>}, {transform_indices = @transform_9, window_bounds = array<i64: 8, 128>}, {transform_indices = @transform_10, window_bounds = array<i64: 8, 128>}]} {
    %c0 = arith.constant 0 : index
    %c0_0 = arith.constant 0 : index
    %0 = vector.load %arg1[%c0, %c0_0] : memref<8x128xf32, #tpu.memory_space<vmem>>, vector<8x128xf32>
    %c0_1 = arith.constant 0 : index
    %c0_2 = arith.constant 0 : index
    %1 = vector.load %arg2[%c0_1, %c0_2] : memref<8x128xf32, #tpu.memory_space<vmem>>, vector<8x128xf32>
    %2 = arith.truncf %0 : vector<8x128xf32> to vector<8x128xbf16>
    %c0_3 = arith.constant 0 : index
    %c0_4 = arith.constant 0 : index
    %3 = vector.load %arg3[%c0_3, %c0_4] : memref<128x128xbf16, #tpu.memory_space<vmem>>, vector<128x128xbf16>
    %cst = arith.constant dense<0.000000e+00> : vector<8x128xf32>
    %4 = tpu.matmul %2, %3, %cst {dimension_numbers = #tpu.dot_dimension_numbers<[1], [0], [0], [1], [0, 0, 1, 1], [], []>} : vector<8x128xbf16>, vector<128x128xbf16>, vector<8x128xf32> -> vector<8x128xf32>
    %5 = arith.truncf %1 : vector<8x128xf32> to vector<8x128xbf16>
    %c0_5 = arith.constant 0 : index
    %c0_6 = arith.constant 0 : index
    %6 = vector.load %arg4[%c0_5, %c0_6] : memref<128x128xbf16, #tpu.memory_space<vmem>>, vector<128x128xbf16>
    %cst_7 = arith.constant dense<0.000000e+00> : vector<8x128xf32>
    %7 = tpu.matmul %5, %6, %cst_7 {dimension_numbers = #tpu.dot_dimension_numbers<[1], [0], [0], [1], [0, 0, 1, 1], [], []>} : vector<8x128xbf16>, vector<128x128xbf16>, vector<8x128xf32> -> vector<8x128xf32>
    %8 = arith.addf %4, %7 : vector<8x128xf32>
    %c0_8 = arith.constant 0 : index
    %c0_9 = arith.constant 0 : index
    %9 = vector.load %arg5[%c0_8, %c0_9] : memref<1x128xf32, #tpu.memory_space<vmem>>, vector<1x128xf32>
    %10 = vector.broadcast %9 : vector<1x128xf32> to vector<8x128xf32>
    %11 = arith.addf %8, %10 : vector<8x128xf32>
    %12 = arith.negf %11 : vector<8x128xf32>
    %13 = math.exp %12 : vector<8x128xf32>
    %cst_10 = arith.constant 1.000000e+00 : f32
    %14 = vector.broadcast %cst_10 : f32 to vector<8x128xf32>
    %15 = arith.addf %14, %13 : vector<8x128xf32>
    %16 = arith.divf %14, %15 : vector<8x128xf32>
    %17 = arith.mulf %11, %16 : vector<8x128xf32>
    %18 = arith.truncf %17 : vector<8x128xf32> to vector<8x128xbf16>
    %c0_11 = arith.constant 0 : index
    %c0_12 = arith.constant 0 : index
    %19 = vector.load %arg6[%c0_11, %c0_12] : memref<128x128xbf16, #tpu.memory_space<vmem>>, vector<128x128xbf16>
    %cst_13 = arith.constant dense<0.000000e+00> : vector<8x128xf32>
    %20 = tpu.matmul %18, %19, %cst_13 {dimension_numbers = #tpu.dot_dimension_numbers<[1], [0], [0], [1], [0, 0, 1, 1], [], []>} : vector<8x128xbf16>, vector<128x128xbf16>, vector<8x128xf32> -> vector<8x128xf32>
    %c0_14 = arith.constant 0 : index
    %c0_15 = arith.constant 0 : index
    %21 = vector.load %arg7[%c0_14, %c0_15] : memref<1x128xf32, #tpu.memory_space<vmem>>, vector<1x128xf32>
    %22 = vector.broadcast %21 : vector<1x128xf32> to vector<8x128xf32>
    %23 = arith.addf %20, %22 : vector<8x128xf32>
    %24 = arith.negf %23 : vector<8x128xf32>
    %25 = math.exp %24 : vector<8x128xf32>
    %cst_16 = arith.constant 1.000000e+00 : f32
    %26 = vector.broadcast %cst_16 : f32 to vector<8x128xf32>
    %27 = arith.addf %26, %25 : vector<8x128xf32>
    %28 = arith.divf %26, %27 : vector<8x128xf32>
    %29 = arith.mulf %23, %28 : vector<8x128xf32>
    %30 = arith.addf %0, %29 : vector<8x128xf32>
    %c0_17 = arith.constant 0 : index
    %c0_18 = arith.constant 0 : index
    %31 = vector.load %arg10[%c0_17, %c0_18] : memref<8x128xf32, #tpu.memory_space<vmem>>, vector<8x128xf32>
    tpu.vector_store %arg10[%c0_17, %c0_18], %30 {strides = array<i32>} : memref<8x128xf32, #tpu.memory_space<vmem>>, vector<8x128xf32>,
    %32 = arith.truncf %30 : vector<8x128xf32> to vector<8x128xbf16>
    %c0_19 = arith.constant 0 : index
    %c0_20 = arith.constant 0 : index
    %33 = vector.load %arg8[%c0_19, %c0_20] : memref<128x128xbf16, #tpu.memory_space<vmem>>, vector<128x128xbf16>
    %cst_21 = arith.constant dense<0.000000e+00> : vector<8x128xf32>
    %34 = tpu.matmul %32, %33, %cst_21 {dimension_numbers = #tpu.dot_dimension_numbers<[1], [0], [0], [1], [0, 0, 1, 1], [], []>} : vector<8x128xbf16>, vector<128x128xbf16>, vector<8x128xf32> -> vector<8x128xf32>
    %c0_22 = arith.constant 0 : index
    %c0_23 = arith.constant 0 : index
    %35 = vector.load %arg9[%c0_22, %c0_23] : memref<1x128xf32, #tpu.memory_space<vmem>>, vector<1x128xf32>
    %36 = vector.broadcast %35 : vector<1x128xf32> to vector<8x128xf32>
    %37 = arith.addf %34, %36 : vector<8x128xf32>
    %c0_24 = arith.constant 0 : index
    %c0_25 = arith.constant 0 : index
    %38 = vector.load %arg11[%c0_24, %c0_25] : memref<8x128xf32, #tpu.memory_space<vmem>>, vector<8x128xf32>
    tpu.vector_store %arg11[%c0_24, %c0_25], %37 {strides = array<i32>} : memref<8x128xf32, #tpu.memory_space<vmem>>, vector<8x128xf32>,
    return
  }
  func.func @transform_0(%arg0: i32) -> (i32, i32) {
    %c0_i32 = arith.constant 0 : i32
    %c0_i32_0 = arith.constant 0 : i32
    return %arg0, %c0_i32 : i32, i32
  }
  func.func @transform_1(%arg0: i32) -> (i32, i32) {
    %c0_i32 = arith.constant 0 : i32
    %c0_i32_0 = arith.constant 0 : i32
    return %arg0, %c0_i32 : i32, i32
  }
  func.func @transform_2(%arg0: i32) -> (i32, i32) {
    %c0_i32 = arith.constant 0 : i32
    %c0_i32_0 = arith.constant 0 : i32
    %c0_i32_1 = arith.constant 0 : i32
    return %c0_i32, %c0_i32_0 : i32, i32
  }
  func.func @transform_3(%arg0: i32) -> (i32, i32) {
    %c0_i32 = arith.constant 0 : i32
    %c0_i32_0 = arith.constant 0 : i32
    %c0_i32_1 = arith.constant 0 : i32
    return %c0_i32, %c0_i32_0 : i32, i32
  }
  func.func @transform_4(%arg0: i32) -> (i32, i32) {
    %c0_i32 = arith.constant 0 : i32
    %c0_i32_0 = arith.constant 0 : i32
    %c0_i32_1 = arith.constant 0 : i32
    return %c0_i32, %c0_i32_0 : i32, i32
  }
  func.func @transform_5(%arg0: i32) -> (i32, i32) {
    %c0_i32 = arith.constant 0 : i32
    %c0_i32_0 = arith.constant 0 : i32
    %c0_i32_1 = arith.constant 0 : i32
    return %c0_i32, %c0_i32_0 : i32, i32
  }
  func.func @transform_6(%arg0: i32) -> (i32, i32) {
    %c0_i32 = arith.constant 0 : i32
    %c0_i32_0 = arith.constant 0 : i32
    %c0_i32_1 = arith.constant 0 : i32
    return %c0_i32, %c0_i32_0 : i32, i32
  }
  func.func @transform_7(%arg0: i32) -> (i32, i32) {
    %c0_i32 = arith.constant 0 : i32
    %c0_i32_0 = arith.constant 0 : i32
    %c0_i32_1 = arith.constant 0 : i32
    return %c0_i32, %c0_i32_0 : i32, i32
  }
  func.func @transform_8(%arg0: i32) -> (i32, i32) {
    %c0_i32 = arith.constant 0 : i32
    %c0_i32_0 = arith.constant 0 : i32
    %c0_i32_1 = arith.constant 0 : i32
    return %c0_i32, %c0_i32_0 : i32, i32
  }
  func.func @transform_9(%arg0: i32) -> (i32, i32) {
    %c0_i32 = arith.constant 0 : i32
    %c0_i32_0 = arith.constant 0 : i32
    return %arg0, %c0_i32 : i32, i32
  }
  func.func @transform_10(%arg0: i32) -> (i32, i32) {
    %c0_i32 = arith.constant 0 : i32
    %c0_i32_0 = arith.constant 0 : i32
    return %arg0, %c0_i32 : i32, i32
  }
}

module attributes {stable_mosaic.version = 11 : i64} {
  func.func @_node_kernel(%arg0: i32, %arg1: memref<8x128xf32, #tpu.memory_space<vmem>>, %arg2: memref<8x128xf32, #tpu.memory_space<vmem>>, %arg3: memref<128x128xbf16, #tpu.memory_space<vmem>>, %arg4: memref<128x128xbf16, #tpu.memory_space<vmem>>, %arg5: memref<1x128xf32, #tpu.memory_space<vmem>>, %arg6: memref<128x128xbf16, #tpu.memory_space<vmem>>, %arg7: memref<1x128xf32, #tpu.memory_space<vmem>>, %arg8: memref<8x128xf32, #tpu.memory_space<vmem>>) attributes {dimension_semantics = [#tpu.dimension_semantics<parallel>], iteration_bounds = array<i64: 1>, scalar_prefetch = 0 : i64, scratch_operands = 0 : i64, tpu.core_type = #tpu.core_type<tc>, window_params = [{transform_indices = @transform_0, window_bounds = array<i64: 8, 128>}, {transform_indices = @transform_1, window_bounds = array<i64: 8, 128>}, {pipeline_mode = #tpu.pipeline_mode<synchronous>, transform_indices = @transform_2, window_bounds = array<i64: 128, 128>}, {pipeline_mode = #tpu.pipeline_mode<synchronous>, transform_indices = @transform_3, window_bounds = array<i64: 128, 128>}, {pipeline_mode = #tpu.pipeline_mode<synchronous>, transform_indices = @transform_4, window_bounds = array<i64: 1, 128>}, {pipeline_mode = #tpu.pipeline_mode<synchronous>, transform_indices = @transform_5, window_bounds = array<i64: 128, 128>}, {pipeline_mode = #tpu.pipeline_mode<synchronous>, transform_indices = @transform_6, window_bounds = array<i64: 1, 128>}, {transform_indices = @transform_7, window_bounds = array<i64: 8, 128>}]} {
    %c0 = arith.constant 0 : index
    %c0_0 = arith.constant 0 : index
    %0 = vector.load %arg1[%c0, %c0_0] : memref<8x128xf32, #tpu.memory_space<vmem>>, vector<8x128xf32>
    %c0_1 = arith.constant 0 : index
    %c0_2 = arith.constant 0 : index
    %1 = vector.load %arg2[%c0_1, %c0_2] : memref<8x128xf32, #tpu.memory_space<vmem>>, vector<8x128xf32>
    %2 = arith.truncf %0 : vector<8x128xf32> to vector<8x128xbf16>
    %c0_3 = arith.constant 0 : index
    %c0_4 = arith.constant 0 : index
    %3 = vector.load %arg3[%c0_3, %c0_4] : memref<128x128xbf16, #tpu.memory_space<vmem>>, vector<128x128xbf16>
    %cst = arith.constant dense<0.000000e+00> : vector<8x128xf32>
    %4 = tpu.matmul %2, %3, %cst {dimension_numbers = #tpu.dot_dimension_numbers<[1], [0], [0], [1], [0, 0, 1, 1], [], []>} : vector<8x128xbf16>, vector<128x128xbf16>, vector<8x128xf32> -> vector<8x128xf32>
    %5 = arith.truncf %1 : vector<8x128xf32> to vector<8x128xbf16>
    %c0_5 = arith.constant 0 : index
    %c0_6 = arith.constant 0 : index
    %6 = vector.load %arg4[%c0_5, %c0_6] : memref<128x128xbf16, #tpu.memory_space<vmem>>, vector<128x128xbf16>
    %cst_7 = arith.constant dense<0.000000e+00> : vector<8x128xf32>
    %7 = tpu.matmul %5, %6, %cst_7 {dimension_numbers = #tpu.dot_dimension_numbers<[1], [0], [0], [1], [0, 0, 1, 1], [], []>} : vector<8x128xbf16>, vector<128x128xbf16>, vector<8x128xf32> -> vector<8x128xf32>
    %8 = arith.addf %4, %7 : vector<8x128xf32>
    %c0_8 = arith.constant 0 : index
    %c0_9 = arith.constant 0 : index
    %9 = vector.load %arg5[%c0_8, %c0_9] : memref<1x128xf32, #tpu.memory_space<vmem>>, vector<1x128xf32>
    %10 = vector.broadcast %9 : vector<1x128xf32> to vector<8x128xf32>
    %11 = arith.addf %8, %10 : vector<8x128xf32>
    %12 = arith.negf %11 : vector<8x128xf32>
    %13 = math.exp %12 : vector<8x128xf32>
    %cst_10 = arith.constant 1.000000e+00 : f32
    %14 = vector.broadcast %cst_10 : f32 to vector<8x128xf32>
    %15 = arith.addf %14, %13 : vector<8x128xf32>
    %16 = arith.divf %14, %15 : vector<8x128xf32>
    %17 = arith.mulf %11, %16 : vector<8x128xf32>
    %18 = arith.truncf %17 : vector<8x128xf32> to vector<8x128xbf16>
    %c0_11 = arith.constant 0 : index
    %c0_12 = arith.constant 0 : index
    %19 = vector.load %arg6[%c0_11, %c0_12] : memref<128x128xbf16, #tpu.memory_space<vmem>>, vector<128x128xbf16>
    %cst_13 = arith.constant dense<0.000000e+00> : vector<8x128xf32>
    %20 = tpu.matmul %18, %19, %cst_13 {dimension_numbers = #tpu.dot_dimension_numbers<[1], [0], [0], [1], [0, 0, 1, 1], [], []>} : vector<8x128xbf16>, vector<128x128xbf16>, vector<8x128xf32> -> vector<8x128xf32>
    %c0_14 = arith.constant 0 : index
    %c0_15 = arith.constant 0 : index
    %21 = vector.load %arg7[%c0_14, %c0_15] : memref<1x128xf32, #tpu.memory_space<vmem>>, vector<1x128xf32>
    %22 = vector.broadcast %21 : vector<1x128xf32> to vector<8x128xf32>
    %23 = arith.addf %20, %22 : vector<8x128xf32>
    %24 = arith.negf %23 : vector<8x128xf32>
    %25 = math.exp %24 : vector<8x128xf32>
    %cst_16 = arith.constant 1.000000e+00 : f32
    %26 = vector.broadcast %cst_16 : f32 to vector<8x128xf32>
    %27 = arith.addf %26, %25 : vector<8x128xf32>
    %28 = arith.divf %26, %27 : vector<8x128xf32>
    %29 = arith.mulf %23, %28 : vector<8x128xf32>
    %30 = arith.addf %0, %29 : vector<8x128xf32>
    %c0_17 = arith.constant 0 : index
    %c0_18 = arith.constant 0 : index
    %31 = vector.load %arg8[%c0_17, %c0_18] : memref<8x128xf32, #tpu.memory_space<vmem>>, vector<8x128xf32>
    tpu.vector_store %arg8[%c0_17, %c0_18], %30 {strides = array<i32>} : memref<8x128xf32, #tpu.memory_space<vmem>>, vector<8x128xf32>,
    return
  }
  func.func @transform_0(%arg0: i32) -> (i32, i32) {
    %c0_i32 = arith.constant 0 : i32
    %c0_i32_0 = arith.constant 0 : i32
    return %arg0, %c0_i32 : i32, i32
  }
  func.func @transform_1(%arg0: i32) -> (i32, i32) {
    %c0_i32 = arith.constant 0 : i32
    %c0_i32_0 = arith.constant 0 : i32
    return %arg0, %c0_i32 : i32, i32
  }
  func.func @transform_2(%arg0: i32) -> (i32, i32) {
    %c0_i32 = arith.constant 0 : i32
    %c0_i32_0 = arith.constant 0 : i32
    %c0_i32_1 = arith.constant 0 : i32
    return %c0_i32, %c0_i32_0 : i32, i32
  }
  func.func @transform_3(%arg0: i32) -> (i32, i32) {
    %c0_i32 = arith.constant 0 : i32
    %c0_i32_0 = arith.constant 0 : i32
    %c0_i32_1 = arith.constant 0 : i32
    return %c0_i32, %c0_i32_0 : i32, i32
  }
  func.func @transform_4(%arg0: i32) -> (i32, i32) {
    %c0_i32 = arith.constant 0 : i32
    %c0_i32_0 = arith.constant 0 : i32
    %c0_i32_1 = arith.constant 0 : i32
    return %c0_i32, %c0_i32_0 : i32, i32
  }
  func.func @transform_5(%arg0: i32) -> (i32, i32) {
    %c0_i32 = arith.constant 0 : i32
    %c0_i32_0 = arith.constant 0 : i32
    %c0_i32_1 = arith.constant 0 : i32
    return %c0_i32, %c0_i32_0 : i32, i32
  }
  func.func @transform_6(%arg0: i32) -> (i32, i32) {
    %c0_i32 = arith.constant 0 : i32
    %c0_i32_0 = arith.constant 0 : i32
    %c0_i32_1 = arith.constant 0 : i32
    return %c0_i32, %c0_i32_0 : i32, i32
  }
  func.func @transform_7(%arg0: i32) -> (i32, i32) {
    %c0_i32 = arith.constant 0 : i32
    %c0_i32_0 = arith.constant 0 : i32
    return %arg0, %c0_i32 : i32, i32
  }
}

</mosaic_0001>

<llo_original>
// kernel: cspnet_forward.8
$region0: #{cspnet_forward.8}
  #allocation0 [shape = 'u32[]', space=smem, size = 0x4, offset = 0x4, fixed_abs, tag = 'smem constant byte address 0x4 - core index']
  #allocation1 [shape = 'u32[72,128]{1,0:T(1,128)}', space=vmem, size = 0x9000, scoped, tag = 'internal scratch']
  %s0 = inlined_call_operand.vmem [shape: f32[8,16], index: 0, kind: input, shape index: {}]
  %s1 = inlined_call_operand.vmem [shape: bf16[16,128], index: 1, kind: input, shape index: {}]
  %s2 = inlined_call_operand.vmem [shape: f32[1,128], index: 2, kind: input, shape index: {}]
  %s3 = inlined_call_operand.vmem [shape: f32[8,128], index: 3, kind: output, shape index: {}]
  %s4 = sld [smem:[#allocation0]]
  $region22: #{cspnet_forward.8} parent=0
    _
  %s6 = ssub.s32 1, %s4
  %s7 = scalar_select 0, %s6, %s4
  // Predicated region
  $region2: #{cspnet_forward.8} parent=0 // pred_check
    _
  $region3: #{cspnet_forward.8} parent=0 // pred_check_branch
    %9 = sbr.rel (0) target = $region5
  $region4: #{cspnet_forward.8} parent=0 // pred_region
    _
  $region5: #{cspnet_forward.8} parent=0 // pred_fallthru
    _
  // Predicated region
  $region6: #{cspnet_forward.8} parent=0 // pred_check
    _
  $region7: #{cspnet_forward.8} parent=0 // pred_check_branch
    %11 = sbr.rel (0) target = $region9
  $region8: #{cspnet_forward.8} parent=0 // pred_region
    _
  $region9: #{cspnet_forward.8} parent=0 // pred_fallthru
    _
  // Predicated region
  $region10: #{cspnet_forward.8} parent=0 // pred_check
    _
  $region11: #{cspnet_forward.8} parent=0 // pred_check_branch
    %13 = sbr.rel (0) target = $region13
  $region12: #{cspnet_forward.8} parent=0 // pred_region
    _
  $region13: #{cspnet_forward.8} parent=0 // pred_fallthru
    _
  %v15 = vld [vmem:[%s0] sm:$0xff]
  %v16 = vpack.c.bf16 %v15, %v15
  %v17 = vld [vmem:[%s1] sm:$0xf]
  %v18 = vld [vmem:[%s1 + $0x4] sm:$0xf]
  %v19 = vld [vmem:[%s2] sm:$0x1]
  %v21 = vperm.slane %v19, 0
  %v25 = vunpack.c.l.b16 %v17
  %v26 = vunpack.c.l.b16 %v18
  %v27 = vpack.c.b16 %v26, %v25
  %vm29 = vcmask 130048
  %v31 = vsel %vm29, %v16, 0
  %33 = vmatpush.bf16.msra.mxu0 0
  %34 = vmatpush.bf16.msra.mxu0 0
  %35 = vmatpush.bf16.msra.mxu0 0
  %36 = vmatpush.bf16.msra.mxu0 0
  %37 = vmatpush.bf16.msra.mxu0 0
  %38 = vmatpush.bf16.msra.mxu0 0
  %39 = vmatpush.bf16.msra.mxu0 0
  %40 = vmatpush.bf16.msra.mxu0 %v27
  %41 = vmatmul.bf16.gmra.mxu0 %v31
  %v42 = vpop.f32.mrf.mxu0
  %v43 = vadd.f32 %v21, %v42
  %v44 = vpop.f32.mrf.mxu0
  %45 = vdwg.mxu0
  %46 = vst [vmem:[%s3] sm:$0xff] %v43
  // Predicated region
  $region14: #{cspnet_forward.8} parent=0 // pred_check
    _
  $region15: #{cspnet_forward.8} parent=0 // pred_check_branch
    %48 = sbr.rel (0) target = $region17
  $region16: #{cspnet_forward.8} parent=0 // pred_region
    _
  $region17: #{cspnet_forward.8} parent=0 // pred_fallthru
    _
  // Predicated region
  $region18: #{cspnet_forward.8} parent=0 // pred_check
    _
  $region19: #{cspnet_forward.8} parent=0 // pred_check_branch
    %50 = sbr.rel (0) target = $region21
  $region20: #{cspnet_forward.8} parent=0 // pred_region
    _
  $region21: #{cspnet_forward.8} parent=0 // pred_fallthru
    _

// kernel: cspnet_forward.9
$region0: #{cspnet_forward.9}
  #allocation0 [shape = 'u32[]', space=smem, size = 0x4, offset = 0x4, fixed_abs, tag = 'smem constant byte address 0x4 - core index']
  #allocation1 [shape = 'u32[72,128]{1,0:T(1,128)}', space=vmem, size = 0x9000, scoped, tag = 'internal scratch']
  %s0 = inlined_call_operand.vmem [shape: bf16[8,128], index: 0, kind: input, shape index: {}]
  %s1 = inlined_call_operand.vmem [shape: bf16[128,256], index: 1, kind: input, shape index: {}]
  %s2 = inlined_call_operand.vmem [shape: f32[1,256], index: 2, kind: input, shape index: {}]
  %s3 = inlined_call_operand.vmem [shape: f32[8,256], index: 3, kind: output, shape index: {}]
  %s4 = sld [smem:[#allocation0]]
  $region22: #{cspnet_forward.9} parent=0
    _
  %s6 = ssub.s32 1, %s4
  %s7 = scalar_select 0, %s6, %s4
  // Predicated region
  $region2: #{cspnet_forward.9} parent=0 // pred_check
    _
  $region3: #{cspnet_forward.9} parent=0 // pred_check_branch
    %9 = sbr.rel (0) target = $region5
  $region4: #{cspnet_forward.9} parent=0 // pred_region
    _
  $region5: #{cspnet_forward.9} parent=0 // pred_fallthru
    _
  // Predicated region
  $region6: #{cspnet_forward.9} parent=0 // pred_check
    _
  $region7: #{cspnet_forward.9} parent=0 // pred_check_branch
    %11 = sbr.rel (0) target = $region9
  $region8: #{cspnet_forward.9} parent=0 // pred_region
    _
  $region9: #{cspnet_forward.9} parent=0 // pred_fallthru
    _
  // Predicated region
  $region10: #{cspnet_forward.9} parent=0 // pred_check
    _
  $region11: #{cspnet_forward.9} parent=0 // pred_check_branch
    %13 = sbr.rel (0) target = $region13
  $region12: #{cspnet_forward.9} parent=0 // pred_region
    _
  $region13: #{cspnet_forward.9} parent=0 // pred_fallthru
    _
  %v14 = vld [vmem:[%s0] sm:$0xf]
  %v15 = vld [vmem:[%s1] sm:$0xff]
  %v16 = vld [vmem:[%s1 + $0x8] sm:$0xff]
  %v17 = vld [vmem:[%s1 + $0x10] sm:$0xff]
  %v18 = vld [vmem:[%s1 + $0x18] sm:$0xff]
  %v19 = vld [vmem:[%s1 + $0x20] sm:$0xff]
  %v20 = vld [vmem:[%s1 + $0x28] sm:$0xff]
  %v21 = vld [vmem:[%s1 + $0x30] sm:$0xff]
  %v22 = vld [vmem:[%s1 + $0x38] sm:$0xff]
  %v23 = vld [vmem:[%s1 + $0x40] sm:$0xff]
  %v24 = vld [vmem:[%s1 + $0x48] sm:$0xff]
  %v25 = vld [vmem:[%s1 + $0x50] sm:$0xff]
  %v26 = vld [vmem:[%s1 + $0x58] sm:$0xff]
  %v27 = vld [vmem:[%s1 + $0x60] sm:$0xff]
  %v28 = vld [vmem:[%s1 + $0x68] sm:$0xff]
  %v29 = vld [vmem:[%s1 + $0x70] sm:$0xff]
  %v30 = vld [vmem:[%s1 + $0x78] sm:$0xff]
  %v31 = vld [vmem:[%s2] sm:$0x3]
  %v33 = vperm.slane %v31, 0
  %v34 = vperm.slane %v31, 1
  %v53 = vunpack.c.l.b16 %v15
  %v54 = vunpack.c.h.b16 %v15
  %v55 = vunpack.c.l.b16 %v16
  %v56 = vunpack.c.h.b16 %v16
  %v57 = vunpack.c.l.b16 %v17
  %v58 = vunpack.c.h.b16 %v17
  %v59 = vunpack.c.l.b16 %v18
  %v60 = vunpack.c.h.b16 %v18
  %v61 = vunpack.c.l.b16 %v19
  %v62 = vunpack.c.h.b16 %v19
  %v63 = vunpack.c.l.b16 %v20
  %v64 = vunpack.c.h.b16 %v20
  %v65 = vunpack.c.l.b16 %v21
  %v66 = vunpack.c.h.b16 %v21
  %v67 = vunpack.c.l.b16 %v22
  %v68 = vunpack.c.h.b16 %v22
  %v69 = vunpack.c.l.b16 %v23
  %v70 = vunpack.c.h.b16 %v23
  %v71 = vunpack.c.l.b16 %v24
  %v72 = vunpack.c.h.b16 %v24
  %v73 = vunpack.c.l.b16 %v25
  %v74 = vunpack.c.h.b16 %v25
  %v75 = vunpack.c.l.b16 %v26
  %v76 = vunpack.c.h.b16 %v26
  %v77 = vunpack.c.l.b16 %v27
  %v78 = vunpack.c.h.b16 %v27
  %v79 = vunpack.c.l.b16 %v28
  %v80 = vunpack.c.h.b16 %v28
  %v81 = vunpack.c.l.b16 %v29
  %v82 = vunpack.c.h.b16 %v29
  %v83 = vunpack.c.l.b16 %v30
  %v84 = vunpack.c.h.b16 %v30
  %v85 = vpack.c.b16 %v55, %v53
  %v86 = vpack.c.b16 %v56, %v54
  %v87 = vpack.c.b16 %v59, %v57
  %v88 = vpack.c.b16 %v60, %v58
  %v89 = vpack.c.b16 %v63, %v61
  %v90 = vpack.c.b16 %v64, %v62
  %v91 = vpack.c.b16 %v67, %v65
  %v92 = vpack.c.b16 %v68, %v66
  %v93 = vpack.c.b16 %v71, %v69
  %v94 = vpack.c.b16 %v72, %v70
  %v95 = vpack.c.b16 %v75, %v73
  %v96 = vpack.c.b16 %v76, %v74
  %v97 = vpack.c.b16 %v79, %v77
  %v98 = vpack.c.b16 %v80, %v78
  %v99 = vpack.c.b16 %v83, %v81
  %v100 = vpack.c.b16 %v84, %v82
  %117 = vmatpush.bf16.msra.mxu0 %v99
  %118 = vmatpush.bf16.msra.mxu0 %v97
  %119 = vmatpush.bf16.msra.mxu0 %v95
  %120 = vmatpush.bf16.msra.mxu0 %v93
  %121 = vmatpush.bf16.msra.mxu0 %v91
  %122 = vmatpush.bf16.msra.mxu0 %v89
  %123 = vmatpush.bf16.msra.mxu0 %v87
  %124 = vmatpush.bf16.msra.mxu0 %v85
  %125 = vmatmul.bf16.gmra.mxu0 %v14
  %v126 = vpop.f32.mrf.mxu0
  %v127 = vadd.f32 %v33, %v126
  %v128 = vpop.f32.mrf.mxu0
  %129 = vdwg.mxu0
  %130 = vmatpush.bf16.msra.mxu0 %v100
  %131 = vmatpush.bf16.msra.mxu0 %v98
  %132 = vmatpush.bf16.msra.mxu0 %v96
  %133 = vmatpush.bf16.msra.mxu0 %v94
  %134 = vmatpush.bf16.msra.mxu0 %v92
  %135 = vmatpush.bf16.msra.mxu0 %v90
  %136 = vmatpush.bf16.msra.mxu0 %v88
  %137 = vmatpush.bf16.msra.mxu0 %v86
  %138 = vmatmul.bf16.gmra.mxu0 %v14
  %v139 = vpop.f32.mrf.mxu0
  %v140 = vadd.f32 %v34, %v139
  %v141 = vpop.f32.mrf.mxu0
  %142 = vdwg.mxu0
  %v143 = vxor.u32 %v127, 2147483648
  %v144 = vxor.u32 %v140, 2147483648
  %v145 = vmul.f32 %v143, 1.442695
  %v146 = vpow.pop %v145
  %v147 = vmul.f32 %v144, 1.442695
  %v148 = vpow.pop %v147
  %v149 = vadd.f32 %v146, 1.0
  %v150 = vadd.f32 %v148, 1.0
  %v151 = vrcp.pop %v149
  %v152 = vmul.f32 %v149, %v151
  %v153 = vsub.f32 1.0, %v152
  %v154 = vmul.f32 %v151, %v153
  %v155 = vadd.f32 %v151, %v154
  %vm156 = vweird.f32 %v149
  %vm157 = vweird.f32 %v151
  %vm158 = vmor %vm156, %vm157
  %v159 = vsel %vm158, %v151, %v155
  %v160 = vand.u32 2147483647, %v149
  %vm161 = vcmp.eq.f32.partialorder %v160, 8.507059e+37
  %v162 = vand.u32 %v149, 2147483648
  %v163 = vor.u32 1.1754944e-38, %v162
  %v164 = vsel %vm161, %v163, %v159
  %v165 = vmul.f32 1.0, %v164
  %v166 = vrcp.pop %v150
  %v167 = vmul.f32 %v150, %v166
  %v168 = vsub.f32 1.0, %v167
  %v169 = vmul.f32 %v166, %v168
  %v170 = vadd.f32 %v166, %v169
  %vm171 = vweird.f32 %v150
  %vm172 = vweird.f32 %v166
  %vm173 = vmor %vm171, %vm172
  %v174 = vsel %vm173, %v166, %v170
  %v175 = vand.u32 2147483647, %v150
  %vm176 = vcmp.eq.f32.partialorder %v175, 8.507059e+37
  %v177 = vand.u32 %v150, 2147483648
  %v178 = vor.u32 1.1754944e-38, %v177
  %v179 = vsel %vm176, %v178, %v174
  %v180 = vmul.f32 1.0, %v179
  %v181 = vmul.f32 %v127, %v165
  %v182 = vmul.f32 %v140, %v180
  %183 = vst [vmem:[%s3] sm:$0xff] %v181
  %184 = vst [vmem:[%s3 + $0x8] sm:$0xff] %v182
  // Predicated region
  $region14: #{cspnet_forward.9} parent=0 // pred_check
    _
  $region15: #{cspnet_forward.9} parent=0 // pred_check_branch
    %186 = sbr.rel (0) target = $region17
  $region16: #{cspnet_forward.9} parent=0 // pred_region
    _
  $region17: #{cspnet_forward.9} parent=0 // pred_fallthru
    _
  // Predicated region
  $region18: #{cspnet_forward.9} parent=0 // pred_check
    _
  $region19: #{cspnet_forward.9} parent=0 // pred_check_branch
    %188 = sbr.rel (0) target = $region21
  $region20: #{cspnet_forward.9} parent=0 // pred_region
    _
  $region21: #{cspnet_forward.9} parent=0 // pred_fallthru
    _

// kernel: cspnet_forward.10
$region0: #{cspnet_forward.10}
  #allocation0 [shape = 'u32[]', space=smem, size = 0x4, offset = 0x4, fixed_abs, tag = 'smem constant byte address 0x4 - core index']
  #allocation1 [shape = 'u32[72,128]{1,0:T(1,128)}', space=vmem, size = 0x9000, scoped, tag = 'internal scratch']
  %s0 = inlined_call_operand.vmem [shape: f32[8,128], index: 0, kind: input, shape index: {}]
  %s1 = inlined_call_operand.vmem [shape: bf16[8,128], index: 1, kind: input, shape index: {}]
  %s2 = inlined_call_operand.vmem [shape: bf16[8,128], index: 2, kind: input, shape index: {}]
  %s3 = inlined_call_operand.vmem [shape: bf16[128,128], index: 3, kind: input, shape index: {}]
  %s4 = inlined_call_operand.vmem [shape: f32[1,128], index: 4, kind: input, shape index: {}]
  %s5 = inlined_call_operand.vmem [shape: f32[1,128], index: 5, kind: input, shape index: {}]
  %s6 = inlined_call_operand.vmem [shape: f32[1,128], index: 6, kind: input, shape index: {}]
  %s7 = inlined_call_operand.vmem [shape: bf16[128,128], index: 7, kind: input, shape index: {}]
  %s8 = inlined_call_operand.vmem [shape: bf16[128,128], index: 8, kind: input, shape index: {}]
  %s9 = inlined_call_operand.vmem [shape: f32[8,128], index: 9, kind: output, shape index: {0}]
  %s10 = inlined_call_operand.vmem [shape: bf16[8,128], index: 10, kind: output, shape index: {1}]
  %s11 = inlined_call_operand.vmem [shape: bf16[8,128], index: 11, kind: output, shape index: {2}]
  %12 = xla_tuple %s9, %s10, %s11
  %s13 = sld [smem:[#allocation0]]
  $region62: #{cspnet_forward.10} parent=0
    _
  %s15 = ssub.s32 1, %s13
  %s16 = scalar_select 0, %s15, %s13
  // Predicated region
  $region2: #{cspnet_forward.10} parent=0 // pred_check
    _
  $region3: #{cspnet_forward.10} parent=0 // pred_check_branch
    %18 = sbr.rel (0) target = $region5
  $region4: #{cspnet_forward.10} parent=0 // pred_region
    _
  $region5: #{cspnet_forward.10} parent=0 // pred_fallthru
    _
  // Predicated region
  $region6: #{cspnet_forward.10} parent=0 // pred_check
    _
  $region7: #{cspnet_forward.10} parent=0 // pred_check_branch
    %20 = sbr.rel (0) target = $region9
  $region8: #{cspnet_forward.10} parent=0 // pred_region
    _
  $region9: #{cspnet_forward.10} parent=0 // pred_fallthru
    _
  // Predicated region
  $region10: #{cspnet_forward.10} parent=0 // pred_check
    _
  $region11: #{cspnet_forward.10} parent=0 // pred_check_branch
    %22 = sbr.rel (0) target = $region13
  $region12: #{cspnet_forward.10} parent=0 // pred_region
    _
  $region13: #{cspnet_forward.10} parent=0 // pred_fallthru
    _
  // Predicated region
  $region14: #{cspnet_forward.10} parent=0 // pred_check
    _
  $region15: #{cspnet_forward.10} parent=0 // pred_check_branch
    %24 = sbr.rel (0) target = $region17
  $region16: #{cspnet_forward.10} parent=0 // pred_region
    _
  $region17: #{cspnet_forward.10} parent=0 // pred_fallthru
    _
  // Predicated region
  $region18: #{cspnet_forward.10} parent=0 // pred_check
    _
  $region19: #{cspnet_forward.10} parent=0 // pred_check_branch
    %26 = sbr.rel (0) target = $region21
  $region20: #{cspnet_forward.10} parent=0 // pred_region
    _
  $region21: #{cspnet_forward.10} parent=0 // pred_fallthru
    _
  // Predicated region
  $region22: #{cspnet_forward.10} parent=0 // pred_check
    _
  $region23: #{cspnet_forward.10} parent=0 // pred_check_branch
    %28 = sbr.rel (0) target = $region25
  $region24: #{cspnet_forward.10} parent=0 // pred_region
    _
  $region25: #{cspnet_forward.10} parent=0 // pred_fallthru
    _
  // Predicated region
  $region26: #{cspnet_forward.10} parent=0 // pred_check
    _
  $region27: #{cspnet_forward.10} parent=0 // pred_check_branch
    %30 = sbr.rel (0) target = $region29
  $region28: #{cspnet_forward.10} parent=0 // pred_region
    _
  $region29: #{cspnet_forward.10} parent=0 // pred_fallthru
    _
  // Predicated region
  $region30: #{cspnet_forward.10} parent=0 // pred_check
    _
  $region31: #{cspnet_forward.10} parent=0 // pred_check_branch
    %32 = sbr.rel (0) target = $region33
  $region32: #{cspnet_forward.10} parent=0 // pred_region
    _
  $region33: #{cspnet_forward.10} parent=0 // pred_fallthru
    _
  // Predicated region
  $region34: #{cspnet_forward.10} parent=0 // pred_check
    _
  $region35: #{cspnet_forward.10} parent=0 // pred_check_branch
    %34 = sbr.rel (0) target = $region37
  $region36: #{cspnet_forward.10} parent=0 // pred_region
    _
  $region37: #{cspnet_forward.10} parent=0 // pred_fallthru
    _
  %v35 = vld [vmem:[%s0] sm:$0xff]
  %v36 = vpack.c.bf16 %v35, %v35
  %v37 = vld [vmem:[%s3] sm:$0xf]
  %v38 = vld [vmem:[%s3 + $0x4] sm:$0xf]
  %v39 = vld [vmem:[%s3 + $0x8] sm:$0xf]
  %v40 = vld [vmem:[%s3 + $0xc] sm:$0xf]
  %v41 = vld [vmem:[%s3 + $0x10] sm:$0xf]
  %v42 = vld [vmem:[%s3 + $0x14] sm:$0xf]
  %v43 = vld [vmem:[%s3 + $0x18] sm:$0xf]
  %v44 = vld [vmem:[%s3 + $0x1c] sm:$0xf]
  %v45 = vld [vmem:[%s3 + $0x20] sm:$0xf]
  %v46 = vld [vmem:[%s3 + $0x24] sm:$0xf]
  %v47 = vld [vmem:[%s3 + $0x28] sm:$0xf]
  %v48 = vld [vmem:[%s3 + $0x2c] sm:$0xf]
  %v49 = vld [vmem:[%s3 + $0x30] sm:$0xf]
  %v50 = vld [vmem:[%s3 + $0x34] sm:$0xf]
  %v51 = vld [vmem:[%s3 + $0x38] sm:$0xf]
  %v52 = vld [vmem:[%s3 + $0x3c] sm:$0xf]
  %v53 = vld [vmem:[%s4] sm:$0x1]
  %v55 = vperm.slane %v53, 0
  %v73 = vunpack.c.l.b16 %v37
  %v74 = vunpack.c.l.b16 %v38
  %v75 = vunpack.c.l.b16 %v39
  %v76 = vunpack.c.l.b16 %v40
  %v77 = vunpack.c.l.b16 %v41
  %v78 = vunpack.c.l.b16 %v42
  %v79 = vunpack.c.l.b16 %v43
  %v80 = vunpack.c.l.b16 %v44
  %v81 = vunpack.c.l.b16 %v45
  %v82 = vunpack.c.l.b16 %v46
  %v83 = vunpack.c.l.b16 %v47
  %v84 = vunpack.c.l.b16 %v48
  %v85 = vunpack.c.l.b16 %v49
  %v86 = vunpack.c.l.b16 %v50
  %v87 = vunpack.c.l.b16 %v51
  %v88 = vunpack.c.l.b16 %v52
  %v89 = vpack.c.b16 %v74, %v73
  %v90 = vpack.c.b16 %v76, %v75
  %v91 = vpack.c.b16 %v78, %v77
  %v92 = vpack.c.b16 %v80, %v79
  %v93 = vpack.c.b16 %v82, %v81
  %v94 = vpack.c.b16 %v84, %v83
  %v95 = vpack.c.b16 %v86, %v85
  %v96 = vpack.c.b16 %v88, %v87
  %105 = vmatpush.bf16.msra.mxu0 %v96
  %106 = vmatpush.bf16.msra.mxu0 %v95
  %107 = vmatpush.bf16.msra.mxu0 %v94
  %108 = vmatpush.bf16.msra.mxu0 %v93
  %109 = vmatpush.bf16.msra.mxu0 %v92
  %110 = vmatpush.bf16.msra.mxu0 %v91
  %111 = vmatpush.bf16.msra.mxu0 %v90
  %112 = vmatpush.bf16.msra.mxu0 %v89
  %113 = vmatmul.bf16.gmra.mxu0 %v36
  %v114 = vpop.f32.mrf.mxu0
  %v115 = vadd.f32 %v55, %v114
  %v116 = vpop.f32.mrf.mxu0
  %117 = vdwg.mxu0
  %118 = vadd.xlane.f32.xlu0 %v115
  %v119 = vpop.xlane.xlu0 %118
  %v120 = vrcp.pop 128.0
  %v121 = vmul.f32 128.0, %v120
  %v122 = vsub.f32 1.0, %v121
  %v123 = vmul.f32 %v120, %v122
  %v124 = vadd.f32 %v120, %v123
  %vm125 = vweird.f32 %v120
  %v126 = vsel %vm125, %v120, %v124
  %v127 = vmul.f32 %v119, %v126
  %v128 = vsub.f32 %v115, %v127
  %v129 = vmul.f32 %v128, %v128
  %130 = vadd.xlane.f32.xlu0 %v129
  %v131 = vpop.xlane.xlu0 %130
  %v132 = vmul.f32 %v131, %v126
  %v133 = vadd.f32 %v132, 1e-05
  %v134 = vrsqrt.pop %v133
  %v135 = vmul.f32 %v134, %v133
  %v136 = vmul.f32 %v135, %v134
  %v137 = vmul.f32 0.5, %v136
  %v138 = vsub.f32 1.5, %v137
  %v139 = vmul.f32 %v134, %v138
  %vm140 = vweird.f32 %v133
  %vm141 = vweird.f32 %v134
  %vm142 = vmor %vm140, %vm141
  %v143 = vsel %vm142, %v134, %v139
  %v144 = vmul.f32 %v128, %v143
  %v145 = vld [vmem:[%s5] sm:$0x1]
  %v147 = vperm.slane %v145, 0
  %v149 = vmul.f32 %v144, %v147
  %v150 = vld [vmem:[%s6] sm:$0x1]
  %v152 = vperm.slane %v150, 0
  %v154 = vadd.f32 %v149, %v152
  %v155 = vld [vmem:[%s1] sm:$0xf]
  %v156 = vunpack.c.l.bf16 %v155
  %v157 = vmul.f32 %v154, %v156
  %v158 = vld [vmem:[%s2] sm:$0xf]
  %v159 = vunpack.c.l.bf16 %v158
  %v160 = vadd.f32 %v157, %v159
  %v161 = vxor.u32 %v160, 2147483648
  %v162 = vmul.f32 %v161, 1.442695
  %v163 = vpow.pop %v162
  %v164 = vadd.f32 %v163, 1.0
  %v165 = vrcp.pop %v164
  %v166 = vmul.f32 %v164, %v165
  %v167 = vsub.f32 1.0, %v166
  %v168 = vmul.f32 %v165, %v167
  %v169 = vadd.f32 %v165, %v168
  %vm170 = vweird.f32 %v164
  %vm171 = vweird.f32 %v165
  %vm172 = vmor %vm170, %vm171
  %v173 = vsel %vm172, %v165, %v169
  %v174 = vand.u32 2147483647, %v164
  %vm175 = vcmp.eq.f32.partialorder %v174, 8.507059e+37
  %v176 = vand.u32 %v164, 2147483648
  %v177 = vor.u32 1.1754944e-38, %v176
  %v178 = vsel %vm175, %v177, %v173
  %v179 = vmul.f32 1.0, %v178
  %v180 = vmul.f32 %v160, %v179
  %v181 = vadd.f32 %v180, %v35
  %182 = vst [vmem:[%s9] sm:$0xff] %v181
  %v183 = vpack.c.bf16 %v181, %v181
  %v184 = vld [vmem:[%s7] sm:$0xf]
  %v185 = vld [vmem:[%s7 + $0x4] sm:$0xf]
  %v186 = vld [vmem:[%s7 + $0x8] sm:$0xf]
  %v187 = vld [vmem:[%s7 + $0xc] sm:$0xf]
  %v188 = vld [vmem:[%s7 + $0x10] sm:$0xf]
  %v189 = vld [vmem:[%s7 + $0x14] sm:$0xf]
  %v190 = vld [vmem:[%s7 + $0x18] sm:$0xf]
  %v191 = vld [vmem:[%s7 + $0x1c] sm:$0xf]
  %v192 = vld [vmem:[%s7 + $0x20] sm:$0xf]
  %v193 = vld [vmem:[%s7 + $0x24] sm:$0xf]
  %v194 = vld [vmem:[%s7 + $0x28] sm:$0xf]
  %v195 = vld [vmem:[%s7 + $0x2c] sm:$0xf]
  %v196 = vld [vmem:[%s7 + $0x30] sm:$0xf]
  %v197 = vld [vmem:[%s7 + $0x34] sm:$0xf]
  %v198 = vld [vmem:[%s7 + $0x38] sm:$0xf]
  %v199 = vld [vmem:[%s7 + $0x3c] sm:$0xf]
  %v216 = vunpack.c.l.b16 %v184
  %v217 = vunpack.c.l.b16 %v185
  %v218 = vunpack.c.l.b16 %v186
  %v219 = vunpack.c.l.b16 %v187
  %v220 = vunpack.c.l.b16 %v188
  %v221 = vunpack.c.l.b16 %v189
  %v222 = vunpack.c.l.b16 %v190
  %v223 = vunpack.c.l.b16 %v191
  %v224 = vunpack.c.l.b16 %v192
  %v225 = vunpack.c.l.b16 %v193
  %v226 = vunpack.c.l.b16 %v194
  %v227 = vunpack.c.l.b16 %v195
  %v228 = vunpack.c.l.b16 %v196
  %v229 = vunpack.c.l.b16 %v197
  %v230 = vunpack.c.l.b16 %v198
  %v231 = vunpack.c.l.b16 %v199
  %v232 = vpack.c.b16 %v217, %v216
  %v233 = vpack.c.b16 %v219, %v218
  %v234 = vpack.c.b16 %v221, %v220
  %v235 = vpack.c.b16 %v223, %v222
  %v236 = vpack.c.b16 %v225, %v224
  %v237 = vpack.c.b16 %v227, %v226
  %v238 = vpack.c.b16 %v229, %v228
  %v239 = vpack.c.b16 %v231, %v230
  %248 = vmatpush.bf16.msra.mxu0 %v239
  %249 = vmatpush.bf16.msra.mxu0 %v238
  %250 = vmatpush.bf16.msra.mxu0 %v237
  %251 = vmatpush.bf16.msra.mxu0 %v236
  %252 = vmatpush.bf16.msra.mxu0 %v235
  %253 = vmatpush.bf16.msra.mxu0 %v234
  %254 = vmatpush.bf16.msra.mxu0 %v233
  %255 = vmatpush.bf16.msra.mxu0 %v232
  %256 = vmatmul.bf16.gmra.mxu0 %v183
  %v257 = vpop.f32.mrf.mxu0
  %v258 = vadd.f32 0.0, %v257
  %v259 = vpop.f32.mrf.mxu0
  %260 = vdwg.mxu0
  %v261 = vpack.c.bf16 %v258, %v258
  %262 = vst [vmem:[%s10] sm:$0xf] %v261
  %v263 = vld [vmem:[%s8] sm:$0xf]
  %v264 = vld [vmem:[%s8 + $0x4] sm:$0xf]
  %v265 = vld [vmem:[%s8 + $0x8] sm:$0xf]
  %v266 = vld [vmem:[%s8 + $0xc] sm:$0xf]
  %v267 = vld [vmem:[%s8 + $0x10] sm:$0xf]
  %v268 = vld [vmem:[%s8 + $0x14] sm:$0xf]
  %v269 = vld [vmem:[%s8 + $0x18] sm:$0xf]
  %v270 = vld [vmem:[%s8 + $0x1c] sm:$0xf]
  %v271 = vld [vmem:[%s8 + $0x20] sm:$0xf]
  %v272 = vld [vmem:[%s8 + $0x24] sm:$0xf]
  %v273 = vld [vmem:[%s8 + $0x28] sm:$0xf]
  %v274 = vld [vmem:[%s8 + $0x2c] sm:$0xf]
  %v275 = vld [vmem:[%s8 + $0x30] sm:$0xf]
  %v276 = vld [vmem:[%s8 + $0x34] sm:$0xf]
  %v277 = vld [vmem:[%s8 + $0x38] sm:$0xf]
  %v278 = vld [vmem:[%s8 + $0x3c] sm:$0xf]
  %v295 = vunpack.c.l.b16 %v263
  %v296 = vunpack.c.l.b16 %v264
  %v297 = vunpack.c.l.b16 %v265
  %v298 = vunpack.c.l.b16 %v266
  %v299 = vunpack.c.l.b16 %v267
  %v300 = vunpack.c.l.b16 %v268
  %v301 = vunpack.c.l.b16 %v269
  %v302 = vunpack.c.l.b16 %v270
  %v303 = vunpack.c.l.b16 %v271
  %v304 = vunpack.c.l.b16 %v272
  %v305 = vunpack.c.l.b16 %v273
  %v306 = vunpack.c.l.b16 %v274
  %v307 = vunpack.c.l.b16 %v275
  %v308 = vunpack.c.l.b16 %v276
  %v309 = vunpack.c.l.b16 %v277
  %v310 = vunpack.c.l.b16 %v278
  %v311 = vpack.c.b16 %v296, %v295
  %v312 = vpack.c.b16 %v298, %v297
  %v313 = vpack.c.b16 %v300, %v299
  %v314 = vpack.c.b16 %v302, %v301
  %v315 = vpack.c.b16 %v304, %v303
  %v316 = vpack.c.b16 %v306, %v305
  %v317 = vpack.c.b16 %v308, %v307
  %v318 = vpack.c.b16 %v310, %v309
  %327 = vmatpush.bf16.msra.mxu0 %v318
  %328 = vmatpush.bf16.msra.mxu0 %v317
  %329 = vmatpush.bf16.msra.mxu0 %v316
  %330 = vmatpush.bf16.msra.mxu0 %v315
  %331 = vmatpush.bf16.msra.mxu0 %v314
  %332 = vmatpush.bf16.msra.mxu0 %v313
  %333 = vmatpush.bf16.msra.mxu0 %v312
  %334 = vmatpush.bf16.msra.mxu0 %v311
  %335 = vmatmul.bf16.gmra.mxu0 %v183
  %v336 = vpop.f32.mrf.mxu0
  %v337 = vadd.f32 0.0, %v336
  %v338 = vpop.f32.mrf.mxu0
  %339 = vdwg.mxu0
  %v340 = vpack.c.bf16 %v337, %v337
  %341 = vst [vmem:[%s11] sm:$0xf] %v340
  // Predicated region
  $region38: #{cspnet_forward.10} parent=0 // pred_check
    _
  $region39: #{cspnet_forward.10} parent=0 // pred_check_branch
    %343 = sbr.rel (0) target = $region41
  $region40: #{cspnet_forward.10} parent=0 // pred_region
    _
  $region41: #{cspnet_forward.10} parent=0 // pred_fallthru
    _
  // Predicated region
  $region42: #{cspnet_forward.10} parent=0 // pred_check
    _
  $region43: #{cspnet_forward.10} parent=0 // pred_check_branch
    %345 = sbr.rel (0) target = $region45
  $region44: #{cspnet_forward.10} parent=0 // pred_region
    _
  $region45: #{cspnet_forward.10} parent=0 // pred_fallthru
    _
  // Predicated region
  $region46: #{cspnet_forward.10} parent=0 // pred_check
    _
  $region47: #{cspnet_forward.10} parent=0 // pred_check_branch
    %347 = sbr.rel (0) target = $region49
  $region48: #{cspnet_forward.10} parent=0 // pred_region
    _
  $region49: #{cspnet_forward.10} parent=0 // pred_fallthru
    _
  // Predicated region
  $region50: #{cspnet_forward.10} parent=0 // pred_check
    _
  $region51: #{cspnet_forward.10} parent=0 // pred_check_branch
    %349 = sbr.rel (0) target = $region53
  $region52: #{cspnet_forward.10} parent=0 // pred_region
    _
  $region53: #{cspnet_forward.10} parent=0 // pred_fallthru
    _
  // Predicated region
  $region54: #{cspnet_forward.10} parent=0 // pred_check
    _
  $region55: #{cspnet_forward.10} parent=0 // pred_check_branch
    %351 = sbr.rel (0) target = $region57
  $region56: #{cspnet_forward.10} parent=0 // pred_region
    _
  $region57: #{cspnet_forward.10} parent=0 // pred_fallthru
    _
  // Predicated region
  $region58: #{cspnet_forward.10} parent=0 // pred_check
    _
  $region59: #{cspnet_forward.10} parent=0 // pred_check_branch
    %353 = sbr.rel (0) target = $region61
  $region60: #{cspnet_forward.10} parent=0 // pred_region
    _
  $region61: #{cspnet_forward.10} parent=0 // pred_fallthru
    _

// kernel: cspnet_forward.11
$region0: #{cspnet_forward.11}
  #allocation0 [shape = 'u32[]', space=smem, size = 0x4, offset = 0x4, fixed_abs, tag = 'smem constant byte address 0x4 - core index']
  #allocation1 [shape = 'u32[72,128]{1,0:T(1,128)}', space=vmem, size = 0x9000, scoped, tag = 'internal scratch']
  %s0 = inlined_call_operand.vmem [shape: bf16[40,128], index: 0, kind: input, shape index: {}]
  %s1 = inlined_call_operand.vmem [shape: bf16[40,128], index: 1, kind: input, shape index: {}]
  %s2 = inlined_call_operand.vmem [shape: bf16[40,69], index: 2, kind: input, shape index: {}]
  %s3 = inlined_call_operand.vmem [shape: bf16[69,128], index: 3, kind: input, shape index: {}]
  %s4 = inlined_call_operand.vmem [shape: f32[1,128], index: 4, kind: input, shape index: {}]
  %s5 = inlined_call_operand.vmem [shape: bf16[128,128], index: 5, kind: input, shape index: {}]
  %s6 = inlined_call_operand.vmem [shape: f32[1,128], index: 6, kind: input, shape index: {}]
  %s7 = inlined_call_operand.vmem [shape: f32[40,128], index: 7, kind: output, shape index: {}]
  %s8 = sld [smem:[#allocation0]]
  $region38: #{cspnet_forward.11} parent=0
    _
  %s10 = ssub.s32 1, %s8
  %s11 = scalar_select 0, %s10, %s8
  // Predicated region
  $region2: #{cspnet_forward.11} parent=0 // pred_check
    _
  $region3: #{cspnet_forward.11} parent=0 // pred_check_branch
    %13 = sbr.rel (0) target = $region5
  $region4: #{cspnet_forward.11} parent=0 // pred_region
    _
  $region5: #{cspnet_forward.11} parent=0 // pred_fallthru
    _
  // Predicated region
  $region6: #{cspnet_forward.11} parent=0 // pred_check
    _
  $region7: #{cspnet_forward.11} parent=0 // pred_check_branch
    %15 = sbr.rel (0) target = $region9
  $region8: #{cspnet_forward.11} parent=0 // pred_region
    _
  $region9: #{cspnet_forward.11} parent=0 // pred_fallthru
    _
  // Predicated region
  $region10: #{cspnet_forward.11} parent=0 // pred_check
    _
  $region11: #{cspnet_forward.11} parent=0 // pred_check_branch
    %17 = sbr.rel (0) target = $region13
  $region12: #{cspnet_forward.11} parent=0 // pred_region
    _
  $region13: #{cspnet_forward.11} parent=0 // pred_fallthru
    _
  // Predicated region
  $region14: #{cspnet_forward.11} parent=0 // pred_check
    _
  $region15: #{cspnet_forward.11} parent=0 // pred_check_branch
    %19 = sbr.rel (0) target = $region17
  $region16: #{cspnet_forward.11} parent=0 // pred_region
    _
  $region17: #{cspnet_forward.11} parent=0 // pred_fallthru
    _
  // Predicated region
  $region18: #{cspnet_forward.11} parent=0 // pred_check
    _
  $region19: #{cspnet_forward.11} parent=0 // pred_check_branch
    %21 = sbr.rel (0) target = $region21
  $region20: #{cspnet_forward.11} parent=0 // pred_region
    _
  $region21: #{cspnet_forward.11} parent=0 // pred_fallthru
    _
  // Predicated region
  $region22: #{cspnet_forward.11} parent=0 // pred_check
    _
  $region23: #{cspnet_forward.11} parent=0 // pred_check_branch
    %23 = sbr.rel (0) target = $region25
  $region24: #{cspnet_forward.11} parent=0 // pred_region
    _
  $region25: #{cspnet_forward.11} parent=0 // pred_fallthru
    _
  // Predicated region
  $region26: #{cspnet_forward.11} parent=0 // pred_check
    _
  $region27: #{cspnet_forward.11} parent=0 // pred_check_branch
    %25 = sbr.rel (0) target = $region29
  $region28: #{cspnet_forward.11} parent=0 // pred_region
    _
  $region29: #{cspnet_forward.11} parent=0 // pred_fallthru
    _
  %v27 = vld [vmem:[%s0] sm:$0xf]
  %v28 = vld [vmem:[%s0 + $0x4] sm:$0xf]
  %v29 = vld [vmem:[%s0 + $0x8] sm:$0xf]
  %v30 = vld [vmem:[%s0 + $0xc] sm:$0xf]
  %v31 = vld [vmem:[%s0 + $0x10] sm:$0xf]
  %v32 = vunpack.c.l.bf16 %v27
  %v33 = vunpack.c.l.bf16 %v28
  %v34 = vunpack.c.l.bf16 %v29
  %v35 = vunpack.c.l.bf16 %v30
  %v36 = vunpack.c.l.bf16 %v31
  %v37 = vld [vmem:[%s1] sm:$0xf]
  %v38 = vld [vmem:[%s1 + $0x4] sm:$0xf]
  %v39 = vld [vmem:[%s1 + $0x8] sm:$0xf]
  %v40 = vld [vmem:[%s1 + $0xc] sm:$0xf]
  %v41 = vld [vmem:[%s1 + $0x10] sm:$0xf]
  %v42 = vunpack.c.l.bf16 %v37
  %v43 = vunpack.c.l.bf16 %v38
  %v44 = vunpack.c.l.bf16 %v39
  %v45 = vunpack.c.l.bf16 %v40
  %v46 = vunpack.c.l.bf16 %v41
  %v47 = vadd.f32 %v32, %v42
  %v48 = vadd.f32 %v33, %v43
  %v49 = vadd.f32 %v34, %v44
  %v50 = vadd.f32 %v35, %v45
  %v51 = vadd.f32 %v36, %v46
  %v52 = vld [vmem:[%s2] sm:$0xf]
  %v53 = vld [vmem:[%s2 + $0x4] sm:$0xf]
  %v54 = vld [vmem:[%s2 + $0x8] sm:$0xf]
  %v55 = vld [vmem:[%s2 + $0xc] sm:$0xf]
  %v56 = vld [vmem:[%s2 + $0x10] sm:$0xf]
  %v57 = vld [vmem:[%s3] sm:$0xf]
  %v58 = vld [vmem:[%s3 + $0x4] sm:$0xf]
  %v59 = vld [vmem:[%s3 + $0x8] sm:$0xf]
  %v60 = vld [vmem:[%s3 + $0xc] sm:$0xf]
  %v61 = vld [vmem:[%s3 + $0x10] sm:$0xf]
  %v62 = vld [vmem:[%s3 + $0x14] sm:$0xf]
  %v63 = vld [vmem:[%s3 + $0x18] sm:$0xf]
  %v64 = vld [vmem:[%s3 + $0x1c] sm:$0xf]
  %v65 = vld [vmem:[%s3 + $0x20] sm:$0x7]
  %v71 = vunpack.c.l.b16 %v52
  %v72 = vunpack.c.l.b16 %v53
  %v73 = vunpack.c.l.b16 %v54
  %v74 = vunpack.c.l.b16 %v55
  %v75 = vunpack.c.l.b16 %v56
  %v76 = vpack.c.b16 %v72, %v71
  %v77 = vpack.c.b16 %v74, %v73
  %v78 = vpack.c.b16 %v75, %v75
  %v88 = vunpack.c.l.b16 %v57
  %v89 = vunpack.c.l.b16 %v58
  %v90 = vunpack.c.l.b16 %v59
  %v91 = vunpack.c.l.b16 %v60
  %v92 = vunpack.c.l.b16 %v61
  %v93 = vunpack.c.l.b16 %v62
  %v94 = vunpack.c.l.b16 %v63
  %v95 = vunpack.c.l.b16 %v64
  %v96 = vunpack.c.l.b16 %v65
  %v97 = vpack.c.b16 %v89, %v88
  %v98 = vpack.c.b16 %v91, %v90
  %v99 = vpack.c.b16 %v93, %v92
  %v100 = vpack.c.b16 %v95, %v94
  %v101 = vpack.c.b16 %v96, %v96
  %vm106 = vcmask 564224
  %v108 = vsel %vm106, %v76, 0
  %v111 = vsel %vm106, %v77, 0
  %v114 = vsel %vm106, %v78, 0
  %vm116 = vcmask 1041408
  %vm117 = vcmask 1042432
  %v118 = vsel %vm116, 4294967295, 65535
  %v119 = vsel %vm117, %v118, 0
  %v121 = vand.u32 %v101, %v119
  %123 = vmatpush.bf16.msra.mxu0 0
  %124 = vmatpush.bf16.msra.mxu0 0
  %125 = vmatpush.bf16.msra.mxu0 0
  %126 = vmatpush.bf16.msra.mxu0 %v121
  %127 = vmatpush.bf16.msra.mxu0 %v100
  %128 = vmatpush.bf16.msra.mxu0 %v99
  %129 = vmatpush.bf16.msra.mxu0 %v98
  %130 = vmatpush.bf16.msra.mxu0 %v97
  %131 = vmatmul.bf16.gmra.mxu0 %v108
  %v132 = vpop.f32.mrf.mxu0
  %v133 = vadd.f32 0.0, %v132
  %v134 = vpop.f32.mrf.mxu0
  %v135 = vadd.f32 0.0, %v134
  %136 = vmatmul.bf16.gmra.mxu0 %v111
  %v137 = vpop.f32.mrf.mxu0
  %v138 = vadd.f32 0.0, %v137
  %v139 = vpop.f32.mrf.mxu0
  %v140 = vadd.f32 0.0, %v139
  %141 = vmatmul.bf16.gmra.mxu0 %v114
  %v142 = vpop.f32.mrf.mxu0
  %v143 = vadd.f32 0.0, %v142
  %v144 = vpop.f32.mrf.mxu0
  %145 = vdwg.mxu0
  %v146 = vadd.f32 %v47, %v133
  %v147 = vadd.f32 %v48, %v135
  %v148 = vadd.f32 %v49, %v138
  %v149 = vadd.f32 %v50, %v140
  %v150 = vadd.f32 %v51, %v143
  %v151 = vld [vmem:[%s4] sm:$0x1]
  %v153 = vperm.slane %v151, 0
  %v155 = vadd.f32 %v146, %v153
  %v156 = vadd.f32 %v147, %v153
  %v157 = vadd.f32 %v148, %v153
  %v158 = vadd.f32 %v149, %v153
  %v159 = vadd.f32 %v150, %v153
  %v160 = vxor.u32 %v155, 2147483648
  %v161 = vxor.u32 %v156, 2147483648
  %v162 = vxor.u32 %v157, 2147483648
  %v163 = vxor.u32 %v158, 2147483648
  %v164 = vxor.u32 %v159, 2147483648
  %v165 = vmul.f32 %v160, 1.442695
  %v166 = vpow.pop %v165
  %v167 = vmul.f32 %v161, 1.442695
  %v168 = vpow.pop %v167
  %v169 = vmul.f32 %v162, 1.442695
  %v170 = vpow.pop %v169
  %v171 = vmul.f32 %v163, 1.442695
  %v172 = vpow.pop %v171
  %v173 = vmul.f32 %v164, 1.442695
  %v174 = vpow.pop %v173
  %v175 = vadd.f32 %v166, 1.0
  %v176 = vadd.f32 %v168, 1.0
  %v177 = vadd.f32 %v170, 1.0
  %v178 = vadd.f32 %v172, 1.0
  %v179 = vadd.f32 %v174, 1.0
  %v180 = vrcp.pop %v175
  %v181 = vmul.f32 %v175, %v180
  %v182 = vsub.f32 1.0, %v181
  %v183 = vmul.f32 %v180, %v182
  %v184 = vadd.f32 %v180, %v183
  %vm185 = vweird.f32 %v175
  %vm186 = vweird.f32 %v180
  %vm187 = vmor %vm185, %vm186
  %v188 = vsel %vm187, %v180, %v184
  %v189 = vand.u32 2147483647, %v175
  %vm190 = vcmp.eq.f32.partialorder %v189, 8.507059e+37
  %v191 = vand.u32 %v175, 2147483648
  %v192 = vor.u32 1.1754944e-38, %v191
  %v193 = vsel %vm190, %v192, %v188
  %v194 = vmul.f32 1.0, %v193
  %v195 = vrcp.pop %v176
  %v196 = vmul.f32 %v176, %v195
  %v197 = vsub.f32 1.0, %v196
  %v198 = vmul.f32 %v195, %v197
  %v199 = vadd.f32 %v195, %v198
  %vm200 = vweird.f32 %v176
  %vm201 = vweird.f32 %v195
  %vm202 = vmor %vm200, %vm201
  %v203 = vsel %vm202, %v195, %v199
  %v204 = vand.u32 2147483647, %v176
  %vm205 = vcmp.eq.f32.partialorder %v204, 8.507059e+37
  %v206 = vand.u32 %v176, 2147483648
  %v207 = vor.u32 1.1754944e-38, %v206
  %v208 = vsel %vm205, %v207, %v203
  %v209 = vmul.f32 1.0, %v208
  %v210 = vrcp.pop %v177
  %v211 = vmul.f32 %v177, %v210
  %v212 = vsub.f32 1.0, %v211
  %v213 = vmul.f32 %v210, %v212
  %v214 = vadd.f32 %v210, %v213
  %vm215 = vweird.f32 %v177
  %vm216 = vweird.f32 %v210
  %vm217 = vmor %vm215, %vm216
  %v218 = vsel %vm217, %v210, %v214
  %v219 = vand.u32 2147483647, %v177
  %vm220 = vcmp.eq.f32.partialorder %v219, 8.507059e+37
  %v221 = vand.u32 %v177, 2147483648
  %v222 = vor.u32 1.1754944e-38, %v221
  %v223 = vsel %vm220, %v222, %v218
  %v224 = vmul.f32 1.0, %v223
  %v225 = vrcp.pop %v178
  %v226 = vmul.f32 %v178, %v225
  %v227 = vsub.f32 1.0, %v226
  %v228 = vmul.f32 %v225, %v227
  %v229 = vadd.f32 %v225, %v228
  %vm230 = vweird.f32 %v178
  %vm231 = vweird.f32 %v225
  %vm232 = vmor %vm230, %vm231
  %v233 = vsel %vm232, %v225, %v229
  %v234 = vand.u32 2147483647, %v178
  %vm235 = vcmp.eq.f32.partialorder %v234, 8.507059e+37
  %v236 = vand.u32 %v178, 2147483648
  %v237 = vor.u32 1.1754944e-38, %v236
  %v238 = vsel %vm235, %v237, %v233
  %v239 = vmul.f32 1.0, %v238
  %v240 = vrcp.pop %v179
  %v241 = vmul.f32 %v179, %v240
  %v242 = vsub.f32 1.0, %v241
  %v243 = vmul.f32 %v240, %v242
  %v244 = vadd.f32 %v240, %v243
  %vm245 = vweird.f32 %v179
  %vm246 = vweird.f32 %v240
  %vm247 = vmor %vm245, %vm246
  %v248 = vsel %vm247, %v240, %v244
  %v249 = vand.u32 2147483647, %v179
  %vm250 = vcmp.eq.f32.partialorder %v249, 8.507059e+37
  %v251 = vand.u32 %v179, 2147483648
  %v252 = vor.u32 1.1754944e-38, %v251
  %v253 = vsel %vm250, %v252, %v248
  %v254 = vmul.f32 1.0, %v253
  %v255 = vmul.f32 %v155, %v194
  %v256 = vmul.f32 %v156, %v209
  %v257 = vmul.f32 %v157, %v224
  %v258 = vmul.f32 %v158, %v239
  %v259 = vmul.f32 %v159, %v254
  %v260 = vpack.c.bf16 %v256, %v255
  %v261 = vpack.c.bf16 %v258, %v257
  %v262 = vpack.c.bf16 %v259, %v259
  %v263 = vld [vmem:[%s5] sm:$0xf]
  %v264 = vld [vmem:[%s5 + $0x4] sm:$0xf]
  %v265 = vld [vmem:[%s5 + $0x8] sm:$0xf]
  %v266 = vld [vmem:[%s5 + $0xc] sm:$0xf]
  %v267 = vld [vmem:[%s5 + $0x10] sm:$0xf]
  %v268 = vld [vmem:[%s5 + $0x14] sm:$0xf]
  %v269 = vld [vmem:[%s5 + $0x18] sm:$0xf]
  %v270 = vld [vmem:[%s5 + $0x1c] sm:$0xf]
  %v271 = vld [vmem:[%s5 + $0x20] sm:$0xf]
  %v272 = vld [vmem:[%s5 + $0x24] sm:$0xf]
  %v273 = vld [vmem:[%s5 + $0x28] sm:$0xf]
  %v274 = vld [vmem:[%s5 + $0x2c] sm:$0xf]
  %v275 = vld [vmem:[%s5 + $0x30] sm:$0xf]
  %v276 = vld [vmem:[%s5 + $0x34] sm:$0xf]
  %v277 = vld [vmem:[%s5 + $0x38] sm:$0xf]
  %v278 = vld [vmem:[%s5 + $0x3c] sm:$0xf]
  %v279 = vld [vmem:[%s6] sm:$0x1]
  %v281 = vperm.slane %v279, 0
  %v299 = vunpack.c.l.b16 %v263
  %v300 = vunpack.c.l.b16 %v264
  %v301 = vunpack.c.l.b16 %v265
  %v302 = vunpack.c.l.b16 %v266
  %v303 = vunpack.c.l.b16 %v267
  %v304 = vunpack.c.l.b16 %v268
  %v305 = vunpack.c.l.b16 %v269
  %v306 = vunpack.c.l.b16 %v270
  %v307 = vunpack.c.l.b16 %v271
  %v308 = vunpack.c.l.b16 %v272
  %v309 = vunpack.c.l.b16 %v273
  %v310 = vunpack.c.l.b16 %v274
  %v311 = vunpack.c.l.b16 %v275
  %v312 = vunpack.c.l.b16 %v276
  %v313 = vunpack.c.l.b16 %v277
  %v314 = vunpack.c.l.b16 %v278
  %v315 = vpack.c.b16 %v300, %v299
  %v316 = vpack.c.b16 %v302, %v301
  %v317 = vpack.c.b16 %v304, %v303
  %v318 = vpack.c.b16 %v306, %v305
  %v319 = vpack.c.b16 %v308, %v307
  %v320 = vpack.c.b16 %v310, %v309
  %v321 = vpack.c.b16 %v312, %v311
  %v322 = vpack.c.b16 %v314, %v313
  %331 = vmatpush.bf16.msra.mxu0 %v322
  %332 = vmatpush.bf16.msra.mxu0 %v321
  %333 = vmatpush.bf16.msra.mxu0 %v320
  %334 = vmatpush.bf16.msra.mxu0 %v319
  %335 = vmatpush.bf16.msra.mxu0 %v318
  %336 = vmatpush.bf16.msra.mxu0 %v317
  %337 = vmatpush.bf16.msra.mxu0 %v316
  %338 = vmatpush.bf16.msra.mxu0 %v315
  %339 = vmatmul.bf16.gmra.mxu0 %v260
  %v340 = vpop.f32.mrf.mxu0
  %v341 = vadd.f32 %v281, %v340
  %v342 = vpop.f32.mrf.mxu0
  %v343 = vadd.f32 %v281, %v342
  %344 = vmatmul.bf16.gmra.mxu0 %v261
  %v345 = vpop.f32.mrf.mxu0
  %v346 = vadd.f32 %v281, %v345
  %v347 = vpop.f32.mrf.mxu0
  %v348 = vadd.f32 %v281, %v347
  %349 = vmatmul.bf16.gmra.mxu0 %v262
  %v350 = vpop.f32.mrf.mxu0
  %v351 = vadd.f32 %v281, %v350
  %v352 = vpop.f32.mrf.mxu0
  %353 = vdwg.mxu0
  %v354 = vxor.u32 %v341, 2147483648
  %v355 = vxor.u32 %v343, 2147483648
  %v356 = vxor.u32 %v346, 2147483648
  %v357 = vxor.u32 %v348, 2147483648
  %v358 = vxor.u32 %v351, 2147483648
  %v359 = vmul.f32 %v354, 1.442695
  %v360 = vpow.pop %v359
  %v361 = vmul.f32 %v355, 1.442695
  %v362 = vpow.pop %v361
  %v363 = vmul.f32 %v356, 1.442695
  %v364 = vpow.pop %v363
  %v365 = vmul.f32 %v357, 1.442695
  %v366 = vpow.pop %v365
  %v367 = vmul.f32 %v358, 1.442695
  %v368 = vpow.pop %v367
  %v369 = vadd.f32 %v360, 1.0
  %v370 = vadd.f32 %v362, 1.0
  %v371 = vadd.f32 %v364, 1.0
  %v372 = vadd.f32 %v366, 1.0
  %v373 = vadd.f32 %v368, 1.0
  %v374 = vrcp.pop %v369
  %v375 = vmul.f32 %v369, %v374
  %v376 = vsub.f32 1.0, %v375
  %v377 = vmul.f32 %v374, %v376
  %v378 = vadd.f32 %v374, %v377
  %vm379 = vweird.f32 %v369
  %vm380 = vweird.f32 %v374
  %vm381 = vmor %vm379, %vm380
  %v382 = vsel %vm381, %v374, %v378
  %v383 = vand.u32 2147483647, %v369
  %vm384 = vcmp.eq.f32.partialorder %v383, 8.507059e+37
  %v385 = vand.u32 %v369, 2147483648
  %v386 = vor.u32 1.1754944e-38, %v385
  %v387 = vsel %vm384, %v386, %v382
  %v388 = vmul.f32 1.0, %v387
  %v389 = vrcp.pop %v370
  %v390 = vmul.f32 %v370, %v389
  %v391 = vsub.f32 1.0, %v390
  %v392 = vmul.f32 %v389, %v391
  %v393 = vadd.f32 %v389, %v392
  %vm394 = vweird.f32 %v370
  %vm395 = vweird.f32 %v389
  %vm396 = vmor %vm394, %vm395
  %v397 = vsel %vm396, %v389, %v393
  %v398 = vand.u32 2147483647, %v370
  %vm399 = vcmp.eq.f32.partialorder %v398, 8.507059e+37
  %v400 = vand.u32 %v370, 2147483648
  %v401 = vor.u32 1.1754944e-38, %v400
  %v402 = vsel %vm399, %v401, %v397
  %v403 = vmul.f32 1.0, %v402
  %v404 = vrcp.pop %v371
  %v405 = vmul.f32 %v371, %v404
  %v406 = vsub.f32 1.0, %v405
  %v407 = vmul.f32 %v404, %v406
  %v408 = vadd.f32 %v404, %v407
  %vm409 = vweird.f32 %v371
  %vm410 = vweird.f32 %v404
  %vm411 = vmor %vm409, %vm410
  %v412 = vsel %vm411, %v404, %v408
  %v413 = vand.u32 2147483647, %v371
  %vm414 = vcmp.eq.f32.partialorder %v413, 8.507059e+37
  %v415 = vand.u32 %v371, 2147483648
  %v416 = vor.u32 1.1754944e-38, %v415
  %v417 = vsel %vm414, %v416, %v412
  %v418 = vmul.f32 1.0, %v417
  %v419 = vrcp.pop %v372
  %v420 = vmul.f32 %v372, %v419
  %v421 = vsub.f32 1.0, %v420
  %v422 = vmul.f32 %v419, %v421
  %v423 = vadd.f32 %v419, %v422
  %vm424 = vweird.f32 %v372
  %vm425 = vweird.f32 %v419
  %vm426 = vmor %vm424, %vm425
  %v427 = vsel %vm426, %v419, %v423
  %v428 = vand.u32 2147483647, %v372
  %vm429 = vcmp.eq.f32.partialorder %v428, 8.507059e+37
  %v430 = vand.u32 %v372, 2147483648
  %v431 = vor.u32 1.1754944e-38, %v430
  %v432 = vsel %vm429, %v431, %v427
  %v433 = vmul.f32 1.0, %v432
  %v434 = vrcp.pop %v373
  %v435 = vmul.f32 %v373, %v434
  %v436 = vsub.f32 1.0, %v435
  %v437 = vmul.f32 %v434, %v436
  %v438 = vadd.f32 %v434, %v437
  %vm439 = vweird.f32 %v373
  %vm440 = vweird.f32 %v434
  %vm441 = vmor %vm439, %vm440
  %v442 = vsel %vm441, %v434, %v438
  %v443 = vand.u32 2147483647, %v373
  %vm444 = vcmp.eq.f32.partialorder %v443, 8.507059e+37
  %v445 = vand.u32 %v373, 2147483648
  %v446 = vor.u32 1.1754944e-38, %v445
  %v447 = vsel %vm444, %v446, %v442
  %v448 = vmul.f32 1.0, %v447
  %v449 = vmul.f32 %v341, %v388
  %v450 = vmul.f32 %v343, %v403
  %v451 = vmul.f32 %v346, %v418
  %v452 = vmul.f32 %v348, %v433
  %v453 = vmul.f32 %v351, %v448
  %454 = vst [vmem:[%s7] sm:$0xff] %v449
  %455 = vst [vmem:[%s7 + $0x8] sm:$0xff] %v450
  %456 = vst [vmem:[%s7 + $0x10] sm:$0xff] %v451
  %457 = vst [vmem:[%s7 + $0x18] sm:$0xff] %v452
  %458 = vst [vmem:[%s7 + $0x20] sm:$0xff] %v453
  // Predicated region
  $region30: #{cspnet_forward.11} parent=0 // pred_check
    _
  $region31: #{cspnet_forward.11} parent=0 // pred_check_branch
    %460 = sbr.rel (0) target = $region33
  $region32: #{cspnet_forward.11} parent=0 // pred_region
    _
  $region33: #{cspnet_forward.11} parent=0 // pred_fallthru
    _
  // Predicated region
  $region34: #{cspnet_forward.11} parent=0 // pred_check
    _
  $region35: #{cspnet_forward.11} parent=0 // pred_check_branch
    %462 = sbr.rel (0) target = $region37
  $region36: #{cspnet_forward.11} parent=0 // pred_region
    _
  $region37: #{cspnet_forward.11} parent=0 // pred_fallthru
    _

// kernel: cspnet_forward.15
$region0: #{cspnet_forward.15}
  #allocation0 [shape = 'u32[]', space=smem, size = 0x4, offset = 0x4, fixed_abs, tag = 'smem constant byte address 0x4 - core index']
  #allocation1 [shape = 'u32[72,128]{1,0:T(1,128)}', space=vmem, size = 0x9000, scoped, tag = 'internal scratch']
  %s0 = inlined_call_operand.vmem [shape: f32[8,128], index: 0, kind: input, shape index: {}]
  %s1 = inlined_call_operand.vmem [shape: f32[8,128], index: 1, kind: input, shape index: {}]
  %s2 = inlined_call_operand.vmem [shape: bf16[128,128], index: 2, kind: input, shape index: {}]
  %s3 = inlined_call_operand.vmem [shape: bf16[128,128], index: 3, kind: input, shape index: {}]
  %s4 = inlined_call_operand.vmem [shape: f32[1,128], index: 4, kind: input, shape index: {}]
  %s5 = inlined_call_operand.vmem [shape: bf16[128,128], index: 5, kind: input, shape index: {}]
  %s6 = inlined_call_operand.vmem [shape: f32[1,128], index: 6, kind: input, shape index: {}]
  %s7 = inlined_call_operand.vmem [shape: bf16[128,128], index: 7, kind: input, shape index: {}]
  %s8 = inlined_call_operand.vmem [shape: f32[1,128], index: 8, kind: input, shape index: {}]
  %s9 = inlined_call_operand.hbm [shape: f32[8,128], index: 9, kind: output, shape index: {0}]
  %s10 = inlined_call_operand.vmem [shape: f32[8,128], index: 10, kind: output, shape index: {1}]
  %11 = xla_tuple %s9, %s10
  %s12 = sld [smem:[#allocation0]]
  $region54: #{cspnet_forward.15} parent=0
    _
  %s14 = ssub.s32 1, %s12
  %s15 = scalar_select 0, %s14, %s12
  $region1: #{cspnet_forward.15} parent=0
    #allocation2 [shape = 'u8[4096]{0}', space=vmem, size = 0x1000, scoped, tag = 'output window, operand 0, single buffered']
    #allocation3 [shape = 's32[1]{0}', space=sflag, size = 0x4, scoped, tag = 'scoped memory for cspnet_forward.15']
    %16 = vsyncpa [#allocation3], 0
    // Predicated region
    $region2: #{cspnet_forward.15} parent=1 // pred_check
      _
    $region3: #{cspnet_forward.15} parent=1 // pred_check_branch
      %18 = sbr.rel (0) target = $region5
    $region4: #{cspnet_forward.15} parent=1 // pred_region
      _
    $region5: #{cspnet_forward.15} parent=1 // pred_fallthru
      _
    // Predicated region
    $region6: #{cspnet_forward.15} parent=1 // pred_check
      _
    $region7: #{cspnet_forward.15} parent=1 // pred_check_branch
      %20 = sbr.rel (0) target = $region9
    $region8: #{cspnet_forward.15} parent=1 // pred_region
      _
    $region9: #{cspnet_forward.15} parent=1 // pred_fallthru
      _
    // Predicated region
    $region10: #{cspnet_forward.15} parent=1 // pred_check
      _
    $region11: #{cspnet_forward.15} parent=1 // pred_check_branch
      %22 = sbr.rel (0) target = $region13
    $region12: #{cspnet_forward.15} parent=1 // pred_region
      _
    $region13: #{cspnet_forward.15} parent=1 // pred_fallthru
      _
    // Predicated region
    $region14: #{cspnet_forward.15} parent=1 // pred_check
      _
    $region15: #{cspnet_forward.15} parent=1 // pred_check_branch
      %24 = sbr.rel (0) target = $region17
    $region16: #{cspnet_forward.15} parent=1 // pred_region
      _
    $region17: #{cspnet_forward.15} parent=1 // pred_fallthru
      _
    // Predicated region
    $region18: #{cspnet_forward.15} parent=1 // pred_check
      _
    $region19: #{cspnet_forward.15} parent=1 // pred_check_branch
      %26 = sbr.rel (0) target = $region21
    $region20: #{cspnet_forward.15} parent=1 // pred_region
      _
    $region21: #{cspnet_forward.15} parent=1 // pred_fallthru
      _
    // Predicated region
    $region22: #{cspnet_forward.15} parent=1 // pred_check
      _
    $region23: #{cspnet_forward.15} parent=1 // pred_check_branch
      %28 = sbr.rel (0) target = $region25
    $region24: #{cspnet_forward.15} parent=1 // pred_region
      _
    $region25: #{cspnet_forward.15} parent=1 // pred_fallthru
      _
    // Predicated region
    $region26: #{cspnet_forward.15} parent=1 // pred_check
      _
    $region27: #{cspnet_forward.15} parent=1 // pred_check_branch
      %30 = sbr.rel (0) target = $region29
    $region28: #{cspnet_forward.15} parent=1 // pred_region
      _
    $region29: #{cspnet_forward.15} parent=1 // pred_fallthru
      _
    // Predicated region
    $region30: #{cspnet_forward.15} parent=1 // pred_check
      _
    $region31: #{cspnet_forward.15} parent=1 // pred_check_branch
      %32 = sbr.rel (0) target = $region33
    $region32: #{cspnet_forward.15} parent=1 // pred_region
      _
    $region33: #{cspnet_forward.15} parent=1 // pred_fallthru
      _
    // Predicated region
    $region34: #{cspnet_forward.15} parent=1 // pred_check
      _
    $region35: #{cspnet_forward.15} parent=1 // pred_check_branch
      %34 = sbr.rel (0) target = $region37
    $region36: #{cspnet_forward.15} parent=1 // pred_region
      _
    $region37: #{cspnet_forward.15} parent=1 // pred_fallthru
      _
    %v35 = vld [vmem:[%s0] sm:$0xff]
    %v36 = vld [vmem:[%s1] sm:$0xff]
    %v37 = vpack.c.bf16 %v35, %v35
    %v38 = vld [vmem:[%s2] sm:$0xf]
    %v39 = vld [vmem:[%s2 + $0x4] sm:$0xf]
    %v40 = vld [vmem:[%s2 + $0x8] sm:$0xf]
    %v41 = vld [vmem:[%s2 + $0xc] sm:$0xf]
    %v42 = vld [vmem:[%s2 + $0x10] sm:$0xf]
    %v43 = vld [vmem:[%s2 + $0x14] sm:$0xf]
    %v44 = vld [vmem:[%s2 + $0x18] sm:$0xf]
    %v45 = vld [vmem:[%s2 + $0x1c] sm:$0xf]
    %v46 = vld [vmem:[%s2 + $0x20] sm:$0xf]
    %v47 = vld [vmem:[%s2 + $0x24] sm:$0xf]
    %v48 = vld [vmem:[%s2 + $0x28] sm:$0xf]
    %v49 = vld [vmem:[%s2 + $0x2c] sm:$0xf]
    %v50 = vld [vmem:[%s2 + $0x30] sm:$0xf]
    %v51 = vld [vmem:[%s2 + $0x34] sm:$0xf]
    %v52 = vld [vmem:[%s2 + $0x38] sm:$0xf]
    %v53 = vld [vmem:[%s2 + $0x3c] sm:$0xf]
    %v54 = vpack.c.bf16 %v36, %v36
    %v55 = vld [vmem:[%s3] sm:$0xf]
    %v56 = vld [vmem:[%s3 + $0x4] sm:$0xf]
    %v57 = vld [vmem:[%s3 + $0x8] sm:$0xf]
    %v58 = vld [vmem:[%s3 + $0xc] sm:$0xf]
    %v59 = vld [vmem:[%s3 + $0x10] sm:$0xf]
    %v60 = vld [vmem:[%s3 + $0x14] sm:$0xf]
    %v61 = vld [vmem:[%s3 + $0x18] sm:$0xf]
    %v62 = vld [vmem:[%s3 + $0x1c] sm:$0xf]
    %v63 = vld [vmem:[%s3 + $0x20] sm:$0xf]
    %v64 = vld [vmem:[%s3 + $0x24] sm:$0xf]
    %v65 = vld [vmem:[%s3 + $0x28] sm:$0xf]
    %v66 = vld [vmem:[%s3 + $0x2c] sm:$0xf]
    %v67 = vld [vmem:[%s3 + $0x30] sm:$0xf]
    %v68 = vld [vmem:[%s3 + $0x34] sm:$0xf]
    %v69 = vld [vmem:[%s3 + $0x38] sm:$0xf]
    %v70 = vld [vmem:[%s3 + $0x3c] sm:$0xf]
    %v87 = vunpack.c.l.b16 %v55
    %v88 = vunpack.c.l.b16 %v56
    %v89 = vunpack.c.l.b16 %v57
    %v90 = vunpack.c.l.b16 %v58
    %v91 = vunpack.c.l.b16 %v59
    %v92 = vunpack.c.l.b16 %v60
    %v93 = vunpack.c.l.b16 %v61
    %v94 = vunpack.c.l.b16 %v62
    %v95 = vunpack.c.l.b16 %v63
    %v96 = vunpack.c.l.b16 %v64
    %v97 = vunpack.c.l.b16 %v65
    %v98 = vunpack.c.l.b16 %v66
    %v99 = vunpack.c.l.b16 %v67
    %v100 = vunpack.c.l.b16 %v68
    %v101 = vunpack.c.l.b16 %v69
    %v102 = vunpack.c.l.b16 %v70
    %v103 = vpack.c.b16 %v88, %v87
    %v104 = vpack.c.b16 %v90, %v89
    %v105 = vpack.c.b16 %v92, %v91
    %v106 = vpack.c.b16 %v94, %v93
    %v107 = vpack.c.b16 %v96, %v95
    %v108 = vpack.c.b16 %v98, %v97
    %v109 = vpack.c.b16 %v100, %v99
    %v110 = vpack.c.b16 %v102, %v101
    %119 = vmatpush.bf16.msra.mxu0 %v110
    %120 = vmatpush.bf16.msra.mxu0 %v109
    %121 = vmatpush.bf16.msra.mxu0 %v108
    %122 = vmatpush.bf16.msra.mxu0 %v107
    %123 = vmatpush.bf16.msra.mxu0 %v106
    %124 = vmatpush.bf16.msra.mxu0 %v105
    %125 = vmatpush.bf16.msra.mxu0 %v104
    %126 = vmatpush.bf16.msra.mxu0 %v103
    %127 = vmatmul.bf16.gmra.mxu0 %v54
    %v128 = vpop.f32.mrf.mxu0
    %v129 = vadd.f32 0.0, %v128
    %v130 = vpop.f32.mrf.mxu0
    %131 = vdwg.mxu0
    %v148 = vunpack.c.l.b16 %v38
    %v149 = vunpack.c.l.b16 %v39
    %v150 = vunpack.c.l.b16 %v40
    %v151 = vunpack.c.l.b16 %v41
    %v152 = vunpack.c.l.b16 %v42
    %v153 = vunpack.c.l.b16 %v43
    %v154 = vunpack.c.l.b16 %v44
    %v155 = vunpack.c.l.b16 %v45
    %v156 = vunpack.c.l.b16 %v46
    %v157 = vunpack.c.l.b16 %v47
    %v158 = vunpack.c.l.b16 %v48
    %v159 = vunpack.c.l.b16 %v49
    %v160 = vunpack.c.l.b16 %v50
    %v161 = vunpack.c.l.b16 %v51
    %v162 = vunpack.c.l.b16 %v52
    %v163 = vunpack.c.l.b16 %v53
    %v164 = vpack.c.b16 %v149, %v148
    %v165 = vpack.c.b16 %v151, %v150
    %v166 = vpack.c.b16 %v153, %v152
    %v167 = vpack.c.b16 %v155, %v154
    %v168 = vpack.c.b16 %v157, %v156
    %v169 = vpack.c.b16 %v159, %v158
    %v170 = vpack.c.b16 %v161, %v160
    %v171 = vpack.c.b16 %v163, %v162
    %180 = vmatpush.bf16.msra.mxu0 %v171
    %181 = vmatpush.bf16.msra.mxu0 %v170
    %182 = vmatpush.bf16.msra.mxu0 %v169
    %183 = vmatpush.bf16.msra.mxu0 %v168
    %184 = vmatpush.bf16.msra.mxu0 %v167
    %185 = vmatpush.bf16.msra.mxu0 %v166
    %186 = vmatpush.bf16.msra.mxu0 %v165
    %187 = vmatpush.bf16.msra.mxu0 %v164
    %188 = vmatmul.bf16.gmra.mxu0 %v37
    %v189 = vpop.f32.mrf.mxu0
    %v190 = vadd.f32 %v129, %v189
    %v191 = vpop.f32.mrf.mxu0
    %192 = vdwg.mxu0
    %v193 = vld [vmem:[%s4] sm:$0x1]
    %v195 = vperm.slane %v193, 0
    %v197 = vadd.f32 %v190, %v195
    %v198 = vxor.u32 %v197, 2147483648
    %v199 = vmul.f32 %v198, 1.442695
    %v200 = vpow.pop %v199
    %v201 = vadd.f32 %v200, 1.0
    %v202 = vrcp.pop %v201
    %v203 = vmul.f32 %v201, %v202
    %v204 = vsub.f32 1.0, %v203
    %v205 = vmul.f32 %v202, %v204
    %v206 = vadd.f32 %v202, %v205
    %vm207 = vweird.f32 %v201
    %vm208 = vweird.f32 %v202
    %vm209 = vmor %vm207, %vm208
    %v210 = vsel %vm209, %v202, %v206
    %v211 = vand.u32 2147483647, %v201
    %vm212 = vcmp.eq.f32.partialorder %v211, 8.507059e+37
    %v213 = vand.u32 %v201, 2147483648
    %v214 = vor.u32 1.1754944e-38, %v213
    %v215 = vsel %vm212, %v214, %v210
    %v216 = vmul.f32 1.0, %v215
    %v217 = vmul.f32 %v197, %v216
    %v218 = vpack.c.bf16 %v217, %v217
    %v219 = vld [vmem:[%s5] sm:$0xf]
    %v220 = vld [vmem:[%s5 + $0x4] sm:$0xf]
    %v221 = vld [vmem:[%s5 + $0x8] sm:$0xf]
    %v222 = vld [vmem:[%s5 + $0xc] sm:$0xf]
    %v223 = vld [vmem:[%s5 + $0x10] sm:$0xf]
    %v224 = vld [vmem:[%s5 + $0x14] sm:$0xf]
    %v225 = vld [vmem:[%s5 + $0x18] sm:$0xf]
    %v226 = vld [vmem:[%s5 + $0x1c] sm:$0xf]
    %v227 = vld [vmem:[%s5 + $0x20] sm:$0xf]
    %v228 = vld [vmem:[%s5 + $0x24] sm:$0xf]
    %v229 = vld [vmem:[%s5 + $0x28] sm:$0xf]
    %v230 = vld [vmem:[%s5 + $0x2c] sm:$0xf]
    %v231 = vld [vmem:[%s5 + $0x30] sm:$0xf]
    %v232 = vld [vmem:[%s5 + $0x34] sm:$0xf]
    %v233 = vld [vmem:[%s5 + $0x38] sm:$0xf]
    %v234 = vld [vmem:[%s5 + $0x3c] sm:$0xf]
    %v235 = vld [vmem:[%s6] sm:$0x1]
    %v237 = vperm.slane %v235, 0
    %v255 = vunpack.c.l.b16 %v219
    %v256 = vunpack.c.l.b16 %v220
    %v257 = vunpack.c.l.b16 %v221
    %v258 = vunpack.c.l.b16 %v222
    %v259 = vunpack.c.l.b16 %v223
    %v260 = vunpack.c.l.b16 %v224
    %v261 = vunpack.c.l.b16 %v225
    %v262 = vunpack.c.l.b16 %v226
    %v263 = vunpack.c.l.b16 %v227
    %v264 = vunpack.c.l.b16 %v228
    %v265 = vunpack.c.l.b16 %v229
    %v266 = vunpack.c.l.b16 %v230
    %v267 = vunpack.c.l.b16 %v231
    %v268 = vunpack.c.l.b16 %v232
    %v269 = vunpack.c.l.b16 %v233
    %v270 = vunpack.c.l.b16 %v234
    %v271 = vpack.c.b16 %v256, %v255
    %v272 = vpack.c.b16 %v258, %v257
    %v273 = vpack.c.b16 %v260, %v259
    %v274 = vpack.c.b16 %v262, %v261
    %v275 = vpack.c.b16 %v264, %v263
    %v276 = vpack.c.b16 %v266, %v265
    %v277 = vpack.c.b16 %v268, %v267
    %v278 = vpack.c.b16 %v270, %v269
    %287 = vmatpush.bf16.msra.mxu0 %v278
    %288 = vmatpush.bf16.msra.mxu0 %v277
    %289 = vmatpush.bf16.msra.mxu0 %v276
    %290 = vmatpush.bf16.msra.mxu0 %v275
    %291 = vmatpush.bf16.msra.mxu0 %v274
    %292 = vmatpush.bf16.msra.mxu0 %v273
    %293 = vmatpush.bf16.msra.mxu0 %v272
    %294 = vmatpush.bf16.msra.mxu0 %v271
    %295 = vmatmul.bf16.gmra.mxu0 %v218
    %v296 = vpop.f32.mrf.mxu0
    %v297 = vadd.f32 %v237, %v296
    %v298 = vpop.f32.mrf.mxu0
    %299 = vdwg.mxu0
    %v300 = vxor.u32 %v297, 2147483648
    %v301 = vmul.f32 %v300, 1.442695
    %v302 = vpow.pop %v301
    %v303 = vadd.f32 %v302, 1.0
    %v304 = vrcp.pop %v303
    %v305 = vmul.f32 %v303, %v304
    %v306 = vsub.f32 1.0, %v305
    %v307 = vmul.f32 %v304, %v306
    %v308 = vadd.f32 %v304, %v307
    %vm309 = vweird.f32 %v303
    %vm310 = vweird.f32 %v304
    %vm311 = vmor %vm309, %vm310
    %v312 = vsel %vm311, %v304, %v308
    %v313 = vand.u32 2147483647, %v303
    %vm314 = vcmp.eq.f32.partialorder %v313, 8.507059e+37
    %v315 = vand.u32 %v303, 2147483648
    %v316 = vor.u32 1.1754944e-38, %v315
    %v317 = vsel %vm314, %v316, %v312
    %v318 = vmul.f32 1.0, %v317
    %v319 = vmul.f32 %v297, %v318
    %v320 = vadd.f32 %v35, %v319
    %321 = vst [vmem:[#allocation2] sm:$0xff] %v320
    %v322 = vpack.c.bf16 %v320, %v320
    %v323 = vld [vmem:[%s7] sm:$0xf]
    %v324 = vld [vmem:[%s7 + $0x4] sm:$0xf]
    %v325 = vld [vmem:[%s7 + $0x8] sm:$0xf]
    %v326 = vld [vmem:[%s7 + $0xc] sm:$0xf]
    %v327 = vld [vmem:[%s7 + $0x10] sm:$0xf]
    %v328 = vld [vmem:[%s7 + $0x14] sm:$0xf]
    %v329 = vld [vmem:[%s7 + $0x18] sm:$0xf]
    %v330 = vld [vmem:[%s7 + $0x1c] sm:$0xf]
    %v331 = vld [vmem:[%s7 + $0x20] sm:$0xf]
    %v332 = vld [vmem:[%s7 + $0x24] sm:$0xf]
    %v333 = vld [vmem:[%s7 + $0x28] sm:$0xf]
    %v334 = vld [vmem:[%s7 + $0x2c] sm:$0xf]
    %v335 = vld [vmem:[%s7 + $0x30] sm:$0xf]
    %v336 = vld [vmem:[%s7 + $0x34] sm:$0xf]
    %v337 = vld [vmem:[%s7 + $0x38] sm:$0xf]
    %v338 = vld [vmem:[%s7 + $0x3c] sm:$0xf]
    %v339 = vld [vmem:[%s8] sm:$0x1]
    %v341 = vperm.slane %v339, 0
    %v359 = vunpack.c.l.b16 %v323
    %v360 = vunpack.c.l.b16 %v324
    %v361 = vunpack.c.l.b16 %v325
    %v362 = vunpack.c.l.b16 %v326
    %v363 = vunpack.c.l.b16 %v327
    %v364 = vunpack.c.l.b16 %v328
    %v365 = vunpack.c.l.b16 %v329
    %v366 = vunpack.c.l.b16 %v330
    %v367 = vunpack.c.l.b16 %v331
    %v368 = vunpack.c.l.b16 %v332
    %v369 = vunpack.c.l.b16 %v333
    %v370 = vunpack.c.l.b16 %v334
    %v371 = vunpack.c.l.b16 %v335
    %v372 = vunpack.c.l.b16 %v336
    %v373 = vunpack.c.l.b16 %v337
    %v374 = vunpack.c.l.b16 %v338
    %v375 = vpack.c.b16 %v360, %v359
    %v376 = vpack.c.b16 %v362, %v361
    %v377 = vpack.c.b16 %v364, %v363
    %v378 = vpack.c.b16 %v366, %v365
    %v379 = vpack.c.b16 %v368, %v367
    %v380 = vpack.c.b16 %v370, %v369
    %v381 = vpack.c.b16 %v372, %v371
    %v382 = vpack.c.b16 %v374, %v373
    %391 = vmatpush.bf16.msra.mxu0 %v382
    %392 = vmatpush.bf16.msra.mxu0 %v381
    %393 = vmatpush.bf16.msra.mxu0 %v380
    %394 = vmatpush.bf16.msra.mxu0 %v379
    %395 = vmatpush.bf16.msra.mxu0 %v378
    %396 = vmatpush.bf16.msra.mxu0 %v377
    %397 = vmatpush.bf16.msra.mxu0 %v376
    %398 = vmatpush.bf16.msra.mxu0 %v375
    %399 = vmatmul.bf16.gmra.mxu0 %v322
    %v400 = vpop.f32.mrf.mxu0
    %v401 = vadd.f32 %v341, %v400
    %v402 = vpop.f32.mrf.mxu0
    %403 = vdwg.mxu0
    %404 = vst [vmem:[%s10] sm:$0xff] %v401
    // Predicated region
    $region38: #{cspnet_forward.15} parent=1 // pred_check
      _
    $region39: #{cspnet_forward.15} parent=1 // pred_check_branch
      %406 = sbr.rel (0) target = $region41
    $region40: #{cspnet_forward.15} parent=1 // pred_region
      %408 = vsyncadd [#allocation3], 0
      %s410 = sshll.u32 [#allocation2], 4
      %s411 = int_to_ptr.vmem [resolvable:$true] %s410
      %s412 = sshll.u32 %s9, 4
      %s413 = int_to_ptr.hbm [resolvable:$true] %s412
      %415 = dma.vmem_to_hbm [thread:$0]  %s411, 128, %s413, [#allocation3]
    $region41: #{cspnet_forward.15} parent=1 // pred_fallthru
      _
    // Predicated region
    $region42: #{cspnet_forward.15} parent=1 // pred_check
      _
    $region43: #{cspnet_forward.15} parent=1 // pred_check_branch
      %417 = sbr.rel (0) target = $region45
    $region44: #{cspnet_forward.15} parent=1 // pred_region
      _
    $region45: #{cspnet_forward.15} parent=1 // pred_fallthru
      _
    // Predicated region
    $region46: #{cspnet_forward.15} parent=1 // pred_check
      _
    $region47: #{cspnet_forward.15} parent=1 // pred_check_branch
      %419 = sbr.rel (0) target = $region49
    $region48: #{cspnet_forward.15} parent=1 // pred_region
      %421 = dma.done [#allocation3], 128
    $region49: #{cspnet_forward.15} parent=1 // pred_fallthru
      _
    // Predicated region
    $region50: #{cspnet_forward.15} parent=1 // pred_check
      _
    $region51: #{cspnet_forward.15} parent=1 // pred_check_branch
      %423 = sbr.rel (0) target = $region53
    $region52: #{cspnet_forward.15} parent=1 // pred_region
      _
    $region53: #{cspnet_forward.15} parent=1 // pred_fallthru
      _
    %424 = vsyncpa [#allocation3], 1

// kernel: cspnet_forward.12
$region0: #{cspnet_forward.12}
  #allocation0 [shape = 'u32[]', space=smem, size = 0x4, offset = 0x4, fixed_abs, tag = 'smem constant byte address 0x4 - core index']
  #allocation1 [shape = 'u32[72,128]{1,0:T(1,128)}', space=vmem, size = 0x9000, scoped, tag = 'internal scratch']
  %s0 = inlined_call_operand.vmem [shape: f32[8,128], index: 0, kind: input, shape index: {}]
  %s1 = inlined_call_operand.vmem [shape: f32[8,128], index: 1, kind: input, shape index: {}]
  %s2 = inlined_call_operand.vmem [shape: bf16[128,128], index: 2, kind: input, shape index: {}]
  %s3 = inlined_call_operand.vmem [shape: bf16[128,128], index: 3, kind: input, shape index: {}]
  %s4 = inlined_call_operand.vmem [shape: f32[1,128], index: 4, kind: input, shape index: {}]
  %s5 = inlined_call_operand.vmem [shape: bf16[128,128], index: 5, kind: input, shape index: {}]
  %s6 = inlined_call_operand.vmem [shape: f32[1,128], index: 6, kind: input, shape index: {}]
  %s7 = inlined_call_operand.vmem [shape: f32[8,128], index: 7, kind: output, shape index: {}]
  %s8 = sld [smem:[#allocation0]]
  $region38: #{cspnet_forward.12} parent=0
    _
  %s10 = ssub.s32 1, %s8
  %s11 = scalar_select 0, %s10, %s8
  // Predicated region
  $region2: #{cspnet_forward.12} parent=0 // pred_check
    _
  $region3: #{cspnet_forward.12} parent=0 // pred_check_branch
    %13 = sbr.rel (0) target = $region5
  $region4: #{cspnet_forward.12} parent=0 // pred_region
    _
  $region5: #{cspnet_forward.12} parent=0 // pred_fallthru
    _
  // Predicated region
  $region6: #{cspnet_forward.12} parent=0 // pred_check
    _
  $region7: #{cspnet_forward.12} parent=0 // pred_check_branch
    %15 = sbr.rel (0) target = $region9
  $region8: #{cspnet_forward.12} parent=0 // pred_region
    _
  $region9: #{cspnet_forward.12} parent=0 // pred_fallthru
    _
  // Predicated region
  $region10: #{cspnet_forward.12} parent=0 // pred_check
    _
  $region11: #{cspnet_forward.12} parent=0 // pred_check_branch
    %17 = sbr.rel (0) target = $region13
  $region12: #{cspnet_forward.12} parent=0 // pred_region
    _
  $region13: #{cspnet_forward.12} parent=0 // pred_fallthru
    _
  // Predicated region
  $region14: #{cspnet_forward.12} parent=0 // pred_check
    _
  $region15: #{cspnet_forward.12} parent=0 // pred_check_branch
    %19 = sbr.rel (0) target = $region17
  $region16: #{cspnet_forward.12} parent=0 // pred_region
    _
  $region17: #{cspnet_forward.12} parent=0 // pred_fallthru
    _
  // Predicated region
  $region18: #{cspnet_forward.12} parent=0 // pred_check
    _
  $region19: #{cspnet_forward.12} parent=0 // pred_check_branch
    %21 = sbr.rel (0) target = $region21
  $region20: #{cspnet_forward.12} parent=0 // pred_region
    _
  $region21: #{cspnet_forward.12} parent=0 // pred_fallthru
    _
  // Predicated region
  $region22: #{cspnet_forward.12} parent=0 // pred_check
    _
  $region23: #{cspnet_forward.12} parent=0 // pred_check_branch
    %23 = sbr.rel (0) target = $region25
  $region24: #{cspnet_forward.12} parent=0 // pred_region
    _
  $region25: #{cspnet_forward.12} parent=0 // pred_fallthru
    _
  // Predicated region
  $region26: #{cspnet_forward.12} parent=0 // pred_check
    _
  $region27: #{cspnet_forward.12} parent=0 // pred_check_branch
    %25 = sbr.rel (0) target = $region29
  $region28: #{cspnet_forward.12} parent=0 // pred_region
    _
  $region29: #{cspnet_forward.12} parent=0 // pred_fallthru
    _
  %v26 = vld [vmem:[%s0] sm:$0xff]
  %v27 = vld [vmem:[%s1] sm:$0xff]
  %v28 = vpack.c.bf16 %v26, %v26
  %v29 = vld [vmem:[%s2] sm:$0xf]
  %v30 = vld [vmem:[%s2 + $0x4] sm:$0xf]
  %v31 = vld [vmem:[%s2 + $0x8] sm:$0xf]
  %v32 = vld [vmem:[%s2 + $0xc] sm:$0xf]
  %v33 = vld [vmem:[%s2 + $0x10] sm:$0xf]
  %v34 = vld [vmem:[%s2 + $0x14] sm:$0xf]
  %v35 = vld [vmem:[%s2 + $0x18] sm:$0xf]
  %v36 = vld [vmem:[%s2 + $0x1c] sm:$0xf]
  %v37 = vld [vmem:[%s2 + $0x20] sm:$0xf]
  %v38 = vld [vmem:[%s2 + $0x24] sm:$0xf]
  %v39 = vld [vmem:[%s2 + $0x28] sm:$0xf]
  %v40 = vld [vmem:[%s2 + $0x2c] sm:$0xf]
  %v41 = vld [vmem:[%s2 + $0x30] sm:$0xf]
  %v42 = vld [vmem:[%s2 + $0x34] sm:$0xf]
  %v43 = vld [vmem:[%s2 + $0x38] sm:$0xf]
  %v44 = vld [vmem:[%s2 + $0x3c] sm:$0xf]
  %v45 = vpack.c.bf16 %v27, %v27
  %v46 = vld [vmem:[%s3] sm:$0xf]
  %v47 = vld [vmem:[%s3 + $0x4] sm:$0xf]
  %v48 = vld [vmem:[%s3 + $0x8] sm:$0xf]
  %v49 = vld [vmem:[%s3 + $0xc] sm:$0xf]
  %v50 = vld [vmem:[%s3 + $0x10] sm:$0xf]
  %v51 = vld [vmem:[%s3 + $0x14] sm:$0xf]
  %v52 = vld [vmem:[%s3 + $0x18] sm:$0xf]
  %v53 = vld [vmem:[%s3 + $0x1c] sm:$0xf]
  %v54 = vld [vmem:[%s3 + $0x20] sm:$0xf]
  %v55 = vld [vmem:[%s3 + $0x24] sm:$0xf]
  %v56 = vld [vmem:[%s3 + $0x28] sm:$0xf]
  %v57 = vld [vmem:[%s3 + $0x2c] sm:$0xf]
  %v58 = vld [vmem:[%s3 + $0x30] sm:$0xf]
  %v59 = vld [vmem:[%s3 + $0x34] sm:$0xf]
  %v60 = vld [vmem:[%s3 + $0x38] sm:$0xf]
  %v61 = vld [vmem:[%s3 + $0x3c] sm:$0xf]
  %v78 = vunpack.c.l.b16 %v46
  %v79 = vunpack.c.l.b16 %v47
  %v80 = vunpack.c.l.b16 %v48
  %v81 = vunpack.c.l.b16 %v49
  %v82 = vunpack.c.l.b16 %v50
  %v83 = vunpack.c.l.b16 %v51
  %v84 = vunpack.c.l.b16 %v52
  %v85 = vunpack.c.l.b16 %v53
  %v86 = vunpack.c.l.b16 %v54
  %v87 = vunpack.c.l.b16 %v55
  %v88 = vunpack.c.l.b16 %v56
  %v89 = vunpack.c.l.b16 %v57
  %v90 = vunpack.c.l.b16 %v58
  %v91 = vunpack.c.l.b16 %v59
  %v92 = vunpack.c.l.b16 %v60
  %v93 = vunpack.c.l.b16 %v61
  %v94 = vpack.c.b16 %v79, %v78
  %v95 = vpack.c.b16 %v81, %v80
  %v96 = vpack.c.b16 %v83, %v82
  %v97 = vpack.c.b16 %v85, %v84
  %v98 = vpack.c.b16 %v87, %v86
  %v99 = vpack.c.b16 %v89, %v88
  %v100 = vpack.c.b16 %v91, %v90
  %v101 = vpack.c.b16 %v93, %v92
  %110 = vmatpush.bf16.msra.mxu0 %v101
  %111 = vmatpush.bf16.msra.mxu0 %v100
  %112 = vmatpush.bf16.msra.mxu0 %v99
  %113 = vmatpush.bf16.msra.mxu0 %v98
  %114 = vmatpush.bf16.msra.mxu0 %v97
  %115 = vmatpush.bf16.msra.mxu0 %v96
  %116 = vmatpush.bf16.msra.mxu0 %v95
  %117 = vmatpush.bf16.msra.mxu0 %v94
  %118 = vmatmul.bf16.gmra.mxu0 %v45
  %v119 = vpop.f32.mrf.mxu0
  %v120 = vadd.f32 0.0, %v119
  %v121 = vpop.f32.mrf.mxu0
  %122 = vdwg.mxu0
  %v139 = vunpack.c.l.b16 %v29
  %v140 = vunpack.c.l.b16 %v30
  %v141 = vunpack.c.l.b16 %v31
  %v142 = vunpack.c.l.b16 %v32
  %v143 = vunpack.c.l.b16 %v33
  %v144 = vunpack.c.l.b16 %v34
  %v145 = vunpack.c.l.b16 %v35
  %v146 = vunpack.c.l.b16 %v36
  %v147 = vunpack.c.l.b16 %v37
  %v148 = vunpack.c.l.b16 %v38
  %v149 = vunpack.c.l.b16 %v39
  %v150 = vunpack.c.l.b16 %v40
  %v151 = vunpack.c.l.b16 %v41
  %v152 = vunpack.c.l.b16 %v42
  %v153 = vunpack.c.l.b16 %v43
  %v154 = vunpack.c.l.b16 %v44
  %v155 = vpack.c.b16 %v140, %v139
  %v156 = vpack.c.b16 %v142, %v141
  %v157 = vpack.c.b16 %v144, %v143
  %v158 = vpack.c.b16 %v146, %v145
  %v159 = vpack.c.b16 %v148, %v147
  %v160 = vpack.c.b16 %v150, %v149
  %v161 = vpack.c.b16 %v152, %v151
  %v162 = vpack.c.b16 %v154, %v153
  %171 = vmatpush.bf16.msra.mxu0 %v162
  %172 = vmatpush.bf16.msra.mxu0 %v161
  %173 = vmatpush.bf16.msra.mxu0 %v160
  %174 = vmatpush.bf16.msra.mxu0 %v159
  %175 = vmatpush.bf16.msra.mxu0 %v158
  %176 = vmatpush.bf16.msra.mxu0 %v157
  %177 = vmatpush.bf16.msra.mxu0 %v156
  %178 = vmatpush.bf16.msra.mxu0 %v155
  %179 = vmatmul.bf16.gmra.mxu0 %v28
  %v180 = vpop.f32.mrf.mxu0
  %v181 = vadd.f32 %v120, %v180
  %v182 = vpop.f32.mrf.mxu0
  %183 = vdwg.mxu0
  %v184 = vld [vmem:[%s4] sm:$0x1]
  %v186 = vperm.slane %v184, 0
  %v188 = vadd.f32 %v181, %v186
  %v189 = vxor.u32 %v188, 2147483648
  %v190 = vmul.f32 %v189, 1.442695
  %v191 = vpow.pop %v190
  %v192 = vadd.f32 %v191, 1.0
  %v193 = vrcp.pop %v192
  %v194 = vmul.f32 %v192, %v193
  %v195 = vsub.f32 1.0, %v194
  %v196 = vmul.f32 %v193, %v195
  %v197 = vadd.f32 %v193, %v196
  %vm198 = vweird.f32 %v192
  %vm199 = vweird.f32 %v193
  %vm200 = vmor %vm198, %vm199
  %v201 = vsel %vm200, %v193, %v197
  %v202 = vand.u32 2147483647, %v192
  %vm203 = vcmp.eq.f32.partialorder %v202, 8.507059e+37
  %v204 = vand.u32 %v192, 2147483648
  %v205 = vor.u32 1.1754944e-38, %v204
  %v206 = vsel %vm203, %v205, %v201
  %v207 = vmul.f32 1.0, %v206
  %v208 = vmul.f32 %v188, %v207
  %v209 = vpack.c.bf16 %v208, %v208
  %v210 = vld [vmem:[%s5] sm:$0xf]
  %v211 = vld [vmem:[%s5 + $0x4] sm:$0xf]
  %v212 = vld [vmem:[%s5 + $0x8] sm:$0xf]
  %v213 = vld [vmem:[%s5 + $0xc] sm:$0xf]
  %v214 = vld [vmem:[%s5 + $0x10] sm:$0xf]
  %v215 = vld [vmem:[%s5 + $0x14] sm:$0xf]
  %v216 = vld [vmem:[%s5 + $0x18] sm:$0xf]
  %v217 = vld [vmem:[%s5 + $0x1c] sm:$0xf]
  %v218 = vld [vmem:[%s5 + $0x20] sm:$0xf]
  %v219 = vld [vmem:[%s5 + $0x24] sm:$0xf]
  %v220 = vld [vmem:[%s5 + $0x28] sm:$0xf]
  %v221 = vld [vmem:[%s5 + $0x2c] sm:$0xf]
  %v222 = vld [vmem:[%s5 + $0x30] sm:$0xf]
  %v223 = vld [vmem:[%s5 + $0x34] sm:$0xf]
  %v224 = vld [vmem:[%s5 + $0x38] sm:$0xf]
  %v225 = vld [vmem:[%s5 + $0x3c] sm:$0xf]
  %v226 = vld [vmem:[%s6] sm:$0x1]
  %v228 = vperm.slane %v226, 0
  %v246 = vunpack.c.l.b16 %v210
  %v247 = vunpack.c.l.b16 %v211
  %v248 = vunpack.c.l.b16 %v212
  %v249 = vunpack.c.l.b16 %v213
  %v250 = vunpack.c.l.b16 %v214
  %v251 = vunpack.c.l.b16 %v215
  %v252 = vunpack.c.l.b16 %v216
  %v253 = vunpack.c.l.b16 %v217
  %v254 = vunpack.c.l.b16 %v218
  %v255 = vunpack.c.l.b16 %v219
  %v256 = vunpack.c.l.b16 %v220
  %v257 = vunpack.c.l.b16 %v221
  %v258 = vunpack.c.l.b16 %v222
  %v259 = vunpack.c.l.b16 %v223
  %v260 = vunpack.c.l.b16 %v224
  %v261 = vunpack.c.l.b16 %v225
  %v262 = vpack.c.b16 %v247, %v246
  %v263 = vpack.c.b16 %v249, %v248
  %v264 = vpack.c.b16 %v251, %v250
  %v265 = vpack.c.b16 %v253, %v252
  %v266 = vpack.c.b16 %v255, %v254
  %v267 = vpack.c.b16 %v257, %v256
  %v268 = vpack.c.b16 %v259, %v258
  %v269 = vpack.c.b16 %v261, %v260
  %278 = vmatpush.bf16.msra.mxu0 %v269
  %279 = vmatpush.bf16.msra.mxu0 %v268
  %280 = vmatpush.bf16.msra.mxu0 %v267
  %281 = vmatpush.bf16.msra.mxu0 %v266
  %282 = vmatpush.bf16.msra.mxu0 %v265
  %283 = vmatpush.bf16.msra.mxu0 %v264
  %284 = vmatpush.bf16.msra.mxu0 %v263
  %285 = vmatpush.bf16.msra.mxu0 %v262
  %286 = vmatmul.bf16.gmra.mxu0 %v209
  %v287 = vpop.f32.mrf.mxu0
  %v288 = vadd.f32 %v228, %v287
  %v289 = vpop.f32.mrf.mxu0
  %290 = vdwg.mxu0
  %v291 = vxor.u32 %v288, 2147483648
  %v292 = vmul.f32 %v291, 1.442695
  %v293 = vpow.pop %v292
  %v294 = vadd.f32 %v293, 1.0
  %v295 = vrcp.pop %v294
  %v296 = vmul.f32 %v294, %v295
  %v297 = vsub.f32 1.0, %v296
  %v298 = vmul.f32 %v295, %v297
  %v299 = vadd.f32 %v295, %v298
  %vm300 = vweird.f32 %v294
  %vm301 = vweird.f32 %v295
  %vm302 = vmor %vm300, %vm301
  %v303 = vsel %vm302, %v295, %v299
  %v304 = vand.u32 2147483647, %v294
  %vm305 = vcmp.eq.f32.partialorder %v304, 8.507059e+37
  %v306 = vand.u32 %v294, 2147483648
  %v307 = vor.u32 1.1754944e-38, %v306
  %v308 = vsel %vm305, %v307, %v303
  %v309 = vmul.f32 1.0, %v308
  %v310 = vmul.f32 %v288, %v309
  %v311 = vadd.f32 %v26, %v310
  %312 = vst [vmem:[%s7] sm:$0xff] %v311
  // Predicated region
  $region30: #{cspnet_forward.12} parent=0 // pred_check
    _
  $region31: #{cspnet_forward.12} parent=0 // pred_check_branch
    %314 = sbr.rel (0) target = $region33
  $region32: #{cspnet_forward.12} parent=0 // pred_region
    _
  $region33: #{cspnet_forward.12} parent=0 // pred_fallthru
    _
  // Predicated region
  $region34: #{cspnet_forward.12} parent=0 // pred_check
    _
  $region35: #{cspnet_forward.12} parent=0 // pred_check_branch
    %316 = sbr.rel (0) target = $region37
  $region36: #{cspnet_forward.12} parent=0 // pred_region
    _
  $region37: #{cspnet_forward.12} parent=0 // pred_fallthru
    _

</llo_original>
